<compile_context>
chip_gen: v7x
topology: tpu7x:2x2x1
jax: 0.10.0
libtpu: 0.0.40
codegen_flags: <defaults>
</compile_context>

<pallas_src>
import functools
import math

import jax
import jax.numpy as jnp
from jax.experimental import pallas as pl
from jax.experimental.pallas import tpu as pltpu

LN_EPS = 1e-5  # torch.nn.LayerNorm default


# ----------------------------- in-kernel helpers -----------------------------

def _layernorm_lastdim(x, gamma, beta):
    mu = jnp.mean(x, axis=-1, keepdims=True)
    var = jnp.mean(jnp.square(x - mu), axis=-1, keepdims=True)
    return (x - mu) * jax.lax.rsqrt(var + LN_EPS) * gamma + beta


def _layernorm_2d(x, gamma, beta):
    # LayerNorm over the last TWO dims jointly (normalized_shape=(length, filter_size))
    mu = jnp.mean(x)
    var = jnp.mean(jnp.square(x - mu))
    return (x - mu) * jax.lax.rsqrt(var + LN_EPS) * gamma + beta


def _softmax_lastdim(s):
    m = jnp.max(s, axis=-1, keepdims=True)
    e = jnp.exp(s - m)
    return e * pl.reciprocal(jnp.sum(e, axis=-1, keepdims=True), approx=True)


# --------------------------------- kernels -----------------------------------

def conformer_stack_kernel(nhead, pid_ref, eid_ref, vid_ref,
                           pt_ref, et_ref, vt_ref, pe_ref,
                           wqkv_ref, bqkv_ref, wo_ref, bo_ref, g1_ref, be1_ref,
                           cw1_ref, cb1_ref, cw2_ref, cb2_ref, g2_ref, be2_ref,
                           o_ref, act_ref):
    """Fused: embeddings + positional encoding (at layer 0) followed by one
    post-norm ConformerLayer per grid step along the layer axis.  The activation
    stays resident in the f32 VMEM scratch `act_ref` across the layer loop."""
    l = pl.program_id(1)
    T, D = act_ref.shape
    V = pt_ref.shape[0]
    dh = D // nhead
    scale = 1.0 / math.sqrt(dh)
    bf16 = jnp.bfloat16

    # ---- at the first layer: embedding lookup (exact f32 one-hot matmul) + PE ----
    @pl.when(l == 0)
    def _():
        def embed(id_ref, tab_ref):
            ids = id_ref[0]                                            # (T, 1) int32
            iota = jax.lax.broadcasted_iota(jnp.int32, (T, V), 1)
            onehot = (iota == ids).astype(jnp.float32)
            return jnp.dot(onehot, tab_ref[...], preferred_element_type=jnp.float32)
        act_ref[...] = (embed(pid_ref, pt_ref) + embed(eid_ref, et_ref)
                        + embed(vid_ref, vt_ref) + pe_ref[...])

    x = act_ref[...]                                                    # (T, D) f32
    xb = x.astype(bf16)

    # ---- multi-head self attention (bf16 MXU operands, f32 accumulation) ----
    qkv = jnp.dot(xb, wqkv_ref[0], preferred_element_type=jnp.float32) + bqkv_ref[0]
    qkvb = qkv.astype(bf16)
    q, k, v = qkvb[:, :D], qkvb[:, D:2 * D], qkvb[:, 2 * D:]
    wo = wo_ref[0]                                                      # (D, D) bf16
    attn = jnp.zeros((T, D), jnp.float32)
    for h in range(nhead):
        sl = slice(h * dh, (h + 1) * dh)
        s = jax.lax.dot_general(q[:, sl], k[:, sl],
                                (((1,), (1,)), ((), ())),
                                preferred_element_type=jnp.float32) * scale
        p = _softmax_lastdim(s)
        ctx_h = jnp.dot(p.astype(bf16), v[:, sl], preferred_element_type=jnp.float32)
        attn = attn + jnp.dot(ctx_h.astype(bf16), wo[sl, :],
                              preferred_element_type=jnp.float32)
    attn = attn + bo_ref[0]
    x1 = _layernorm_lastdim(x + attn, g1_ref[0], be1_ref[0])

    # ---- conv feed-forward (k=3, pad=1 along time) as three shifted matmuls ----
    row = jax.lax.broadcasted_iota(jnp.int32, (T, 1), 0)
    x_prev = jnp.where(row == 0, 0.0, pltpu.roll(x1, 1, axis=0))
    x_next = jnp.where(row == T - 1, 0.0, pltpu.roll(x1, T - 1, axis=0))
    hcv = (jnp.dot(x_prev.astype(bf16), cw1_ref[0, 0], preferred_element_type=jnp.float32)
           + jnp.dot(x1.astype(bf16), cw1_ref[0, 1], preferred_element_type=jnp.float32)
           + jnp.dot(x_next.astype(bf16), cw1_ref[0, 2], preferred_element_type=jnp.float32)
           + cb1_ref[0])
    hcv = jnp.maximum(hcv, 0.0)                                         # ReLU
    ff = jnp.dot(hcv.astype(bf16), cw2_ref[0], preferred_element_type=jnp.float32) + cb2_ref[0]
    x2 = _layernorm_lastdim(x1 + ff, g2_ref[0], be2_ref[0])

    act_ref[...] = x2

    @pl.when(l == pl.num_programs(1) - 1)
    def _():
        o_ref[0] = x2


def heads_kernel(x_ref,
                 wo1_ref, bo1_ref, go_ref, beo_ref,
                 wp1_ref, bp1_ref, gp_ref, bep_ref, wp2_ref, bp2_ref,
                 we1_ref, be1b_ref, ge_ref, bee_ref, we2_ref, be2b_ref,
                 wv1_ref, bv1_ref, gv_ref, bev_ref, wv2_ref, bv2_ref,
                 r_ref, p_ref, e_ref, v_ref):
    """Fused output_layer + output_{pitch,energy,vad}:
       reprs = GELU(LN_2d(x @ W + b)); head = GELU(LN_2d(reprs @ W1 + b1)) @ W2 + b2."""
    bf16 = jnp.bfloat16
    x = x_ref[0]
    h = jnp.dot(x.astype(bf16), wo1_ref[...], preferred_element_type=jnp.float32) + bo1_ref[...]
    h = _layernorm_2d(h, go_ref[...], beo_ref[...])
    reprs = jax.nn.gelu(h, approximate=False)                           # exact (erf) GELU
    r_ref[0] = reprs
    rb = reprs.astype(bf16)

    def head(w1, b1, g, be, w2, b2):
        hh = jnp.dot(rb, w1[...], preferred_element_type=jnp.float32) + b1[...]
        hh = _layernorm_2d(hh, g[...], be[...])
        hh = jax.nn.gelu(hh, approximate=False)
        return jnp.dot(hh.astype(bf16), w2[...], preferred_element_type=jnp.float32) + b2[...]

    p_ref[0] = head(wp1_ref, bp1_ref, gp_ref, bep_ref, wp2_ref, bp2_ref)
    e_ref[0] = head(we1_ref, be1b_ref, ge_ref, bee_ref, we2_ref, be2b_ref)
    v_ref[0] = head(wv1_ref, bv1_ref, gv_ref, bev_ref, wv2_ref, bv2_ref)


# ------------------------------ parameters & PE -------------------------------

def sinusoidal_pe(T, D):
    pos = jnp.arange(T, dtype=jnp.float32)[:, None]
    div = jnp.exp(jnp.arange(0, D, 2, dtype=jnp.float32) * (-math.log(10000.0) / D))
    pe = jnp.zeros((T, D), jnp.float32)
    pe = pe.at[:, 0::2].set(jnp.sin(pos * div))
    pe = pe.at[:, 1::2].set(jnp.cos(pos * div))
    return pe


def init_mpm_params(key, *, bins, D, T, nlayers):
    V = bins + 1
    keys = iter(jax.random.split(key, 32))

    def nrm(shape, std=0.02):
        return jax.random.normal(next(keys), shape, jnp.float32) * std

    zeros = lambda shape: jnp.zeros(shape, jnp.float32)
    ones = lambda shape: jnp.ones(shape, jnp.float32)

    params = {
        "pitch_table": nrm((V, D), 1.0),     # nn.Embedding default ~ N(0, 1)
        "energy_table": nrm((V, D), 1.0),
        "vad_table": nrm((V, D), 1.0),
        # Conformer layer weights stacked along a leading layer axis.
        "wqkv": nrm((nlayers, D, 3 * D)), "bqkv": zeros((nlayers, 1, 3 * D)),
        "wo":   nrm((nlayers, D, D)),     "bo":   zeros((nlayers, 1, D)),
        "g1":   ones((nlayers, 1, D)),    "be1":  zeros((nlayers, 1, D)),
        "cw1":  nrm((nlayers, 3, D, D)),  "cb1":  zeros((nlayers, 1, D)),  # Conv1d k=3 taps
        "cw2":  nrm((nlayers, D, D)),     "cb2":  zeros((nlayers, 1, D)),  # Conv1d k=1
        "g2":   ones((nlayers, 1, D)),    "be2":  zeros((nlayers, 1, D)),
    }

    def head(final_out_dim):
        d = dict(w1=nrm((D, D)), b1=zeros((1, D)),
                 g=ones((T, D)), be=zeros((T, D)))      # LayerNorm((length, filter_size))
        if final_out_dim is not None:
            d["w2"] = nrm((D, final_out_dim))
            d["b2"] = zeros((1, final_out_dim))
        return d

    params["output_layer"] = head(None)
    params["output_pitch"] = head(bins)
    params["output_energy"] = head(bins)
    params["output_vad"] = head(bins)
    return params


# --------------------------------- forward ------------------------------------

def mpm_forward(params, pitch_ids, energy_ids, vad_ids, *, nhead, bins,
                return_reprs=False):
    B, T = pitch_ids.shape
    V, D = params["pitch_table"].shape
    L = params["wqkv"].shape[0]
    bf16 = jnp.bfloat16

    pe = sinusoidal_pe(T, D)
    ids3 = lambda ids: ids.astype(jnp.int32).reshape(B, T, 1)

    # --- BlockSpec builders for the fused (B, L) conformer-stack call ---
    def b_spec(shape):          # batched over b, constant over l
        nd = len(shape)
        return pl.BlockSpec((1,) + tuple(shape[1:]), lambda b, l: (b,) + (0,) * (nd - 1))

    def c_spec(shape):          # constant (fetched once)
        nd = len(shape)
        return pl.BlockSpec(tuple(shape), lambda b, l: (0,) * nd)

    def l_spec(shape):          # blocked over the stacked layer axis
        nd = len(shape)
        return pl.BlockSpec((1,) + tuple(shape[1:]), lambda b, l: (l,) + (0,) * (nd - 1))

    batched = [ids3(pitch_ids), ids3(energy_ids), ids3(vad_ids)]
    consts = [params["pitch_table"], params["energy_table"], params["vad_table"], pe]
    # Matmul weights to bf16 at the call boundary; biases / LayerNorm params stay f32.
    stacked = [params["wqkv"].astype(bf16), params["bqkv"],
               params["wo"].astype(bf16), params["bo"],
               params["g1"], params["be1"],
               params["cw1"].astype(bf16), params["cb1"],
               params["cw2"].astype(bf16), params["cb2"],
               params["g2"], params["be2"]]

    x = pl.pallas_call(
        functools.partial(conformer_stack_kernel, nhead),
        grid=(B, L),
        in_specs=([b_spec(a.shape) for a in batched]
                  + [c_spec(a.shape) for a in consts]
                  + [l_spec(a.shape) for a in stacked]),
        out_specs=pl.BlockSpec((1, T, D), lambda b, l: (b, 0, 0)),
        out_shape=jax.ShapeDtypeStruct((B, T, D), jnp.float32),
        scratch_shapes=[pltpu.VMEM((T, D), jnp.float32)],
        compiler_params=pltpu.CompilerParams(
            dimension_semantics=("parallel", "arbitrary")),
    )(*batched, *consts, *stacked)

    # --- fused output_layer + three heads; head outputs padded lane-dense ---
    bins_p = ((bins + 127) // 128) * 128

    def head_weights(hp):
        w2 = jnp.zeros((D, bins_p), jnp.float32).at[:, :bins].set(hp["w2"])
        b2 = jnp.zeros((1, bins_p), jnp.float32).at[:, :bins].set(hp["b2"])
        return [hp["w1"].astype(bf16), hp["b1"], hp["g"], hp["be"], w2.astype(bf16), b2]

    ol = params["output_layer"]
    head_ws = ([ol["w1"].astype(bf16), ol["b1"], ol["g"], ol["be"]]
               + head_weights(params["output_pitch"])
               + head_weights(params["output_energy"])
               + head_weights(params["output_vad"]))

    def hc_spec(a):
        nd = a.ndim
        return pl.BlockSpec(a.shape, lambda b: (0,) * nd)

    reprs, pitch, energy, vad = pl.pallas_call(
        heads_kernel,
        grid=(B,),
        in_specs=[pl.BlockSpec((1, T, D), lambda b: (b, 0, 0))]
                 + [hc_spec(a) for a in head_ws],
        out_specs=(pl.BlockSpec((1, T, D), lambda b: (b, 0, 0)),
                   pl.BlockSpec((1, T, bins_p), lambda b: (b, 0, 0)),
                   pl.BlockSpec((1, T, bins_p), lambda b: (b, 0, 0)),
                   pl.BlockSpec((1, T, bins_p), lambda b: (b, 0, 0))),
        out_shape=(jax.ShapeDtypeStruct((B, T, D), jnp.float32),
                   jax.ShapeDtypeStruct((B, T, bins_p), jnp.float32),
                   jax.ShapeDtypeStruct((B, T, bins_p), jnp.float32),
                   jax.ShapeDtypeStruct((B, T, bins_p), jnp.float32)),
        compiler_params=pltpu.CompilerParams(dimension_semantics=("parallel",)),
    )(x, *head_ws)

    out = {"pitch": pitch[..., :bins],
           "energy": energy[..., :bins],
           "vad": vad[..., :bins]}
    if return_reprs:
        out["reprs"] = reprs
    return out


# ----------------------------------- main --------------------------------------

if __name__ == "__main__":
    # Small shapes consistent with the module (scaled down from
    # bins=128, filter_size=256, length=513, nlayers=8, nhead=2).
    B, T = 2, 8          # batch, sequence length ("length")
    BINS = 16            # bins
    D = 32               # filter_size
    NLAYERS = 2
    NHEAD = 2

    key = jax.random.PRNGKey(0)
    kp, ke, kv, kw = jax.random.split(key, 4)
    pitch_ids = jax.random.randint(kp, (B, T), 0, BINS + 1, dtype=jnp.int32)
    energy_ids = jax.random.randint(ke, (B, T), 0, BINS + 1, dtype=jnp.int32)
    vad_ids = jax.random.randint(kv, (B, T), 0, BINS + 1, dtype=jnp.int32)

    params = init_mpm_params(kw, bins=BINS, D=D, T=T, nlayers=NLAYERS)

    out = mpm_forward(params, pitch_ids, energy_ids, vad_ids,
                      nhead=NHEAD, bins=BINS, return_reprs=True)
    out = jax.block_until_ready(out)

    assert out["pitch"].shape == (B, T, BINS)
    assert out["energy"].shape == (B, T, BINS)
    assert out["vad"].shape == (B, T, BINS)
    assert out["reprs"].shape == (B, T, D)
    assert all(bool(jnp.all(jnp.isfinite(v))) for v in out.values())
    print("KERNEL_OK")
</pallas_src>

<mosaic_0001>
module attributes {stable_mosaic.version = 11 : i64} {
  func.func @conformer_stack_kernel(%arg0: i32, %arg1: i32, %arg2: memref<1x8x1xi32, #tpu.memory_space<vmem>>, %arg3: memref<1x8x1xi32, #tpu.memory_space<vmem>>, %arg4: memref<1x8x1xi32, #tpu.memory_space<vmem>>, %arg5: memref<17x32xf32, #tpu.memory_space<vmem>>, %arg6: memref<17x32xf32, #tpu.memory_space<vmem>>, %arg7: memref<17x32xf32, #tpu.memory_space<vmem>>, %arg8: memref<8x32xf32, #tpu.memory_space<vmem>>, %arg9: memref<1x32x96xbf16, #tpu.memory_space<vmem>>, %arg10: memref<1x1x96xf32, #tpu.memory_space<vmem>>, %arg11: memref<1x32x32xbf16, #tpu.memory_space<vmem>>, %arg12: memref<1x1x32xf32, #tpu.memory_space<vmem>>, %arg13: memref<1x1x32xf32, #tpu.memory_space<vmem>>, %arg14: memref<1x1x32xf32, #tpu.memory_space<vmem>>, %arg15: memref<1x3x32x32xbf16, #tpu.memory_space<vmem>>, %arg16: memref<1x1x32xf32, #tpu.memory_space<vmem>>, %arg17: memref<1x32x32xbf16, #tpu.memory_space<vmem>>, %arg18: memref<1x1x32xf32, #tpu.memory_space<vmem>>, %arg19: memref<1x1x32xf32, #tpu.memory_space<vmem>>, %arg20: memref<1x1x32xf32, #tpu.memory_space<vmem>>, %arg21: memref<1x8x32xf32, #tpu.memory_space<vmem>>, %arg22: memref<8x32xf32, #tpu.memory_space<vmem>>) attributes {dimension_semantics = [#tpu.dimension_semantics<parallel>, #tpu.dimension_semantics<arbitrary>], iteration_bounds = array<i64: 2, 2>, scalar_prefetch = 0 : i64, scratch_operands = 1 : i64, tpu.core_type = #tpu.core_type<tc>, window_params = [{transform_indices = @transform_0, window_bounds = array<i64: 1, 8, 1>}, {transform_indices = @transform_1, window_bounds = array<i64: 1, 8, 1>}, {transform_indices = @transform_2, window_bounds = array<i64: 1, 8, 1>}, {pipeline_mode = #tpu.pipeline_mode<synchronous>, transform_indices = @transform_3, window_bounds = array<i64: 17, 32>}, {pipeline_mode = #tpu.pipeline_mode<synchronous>, transform_indices = @transform_4, window_bounds = array<i64: 17, 32>}, {pipeline_mode = #tpu.pipeline_mode<synchronous>, transform_indices = @transform_5, window_bounds = array<i64: 17, 32>}, {pipeline_mode = #tpu.pipeline_mode<synchronous>, transform_indices = @transform_6, window_bounds = array<i64: 8, 32>}, {transform_indices = @transform_7, window_bounds = array<i64: 1, 32, 96>}, {transform_indices = @transform_8, window_bounds = array<i64: 1, 1, 96>}, {transform_indices = @transform_9, window_bounds = array<i64: 1, 32, 32>}, {transform_indices = @transform_10, window_bounds = array<i64: 1, 1, 32>}, {transform_indices = @transform_11, window_bounds = array<i64: 1, 1, 32>}, {transform_indices = @transform_12, window_bounds = array<i64: 1, 1, 32>}, {transform_indices = @transform_13, window_bounds = array<i64: 1, 3, 32, 32>}, {transform_indices = @transform_14, window_bounds = array<i64: 1, 1, 32>}, {transform_indices = @transform_15, window_bounds = array<i64: 1, 32, 32>}, {transform_indices = @transform_16, window_bounds = array<i64: 1, 1, 32>}, {transform_indices = @transform_17, window_bounds = array<i64: 1, 1, 32>}, {transform_indices = @transform_18, window_bounds = array<i64: 1, 1, 32>}, {transform_indices = @transform_19, window_bounds = array<i64: 1, 8, 32>}]} {
    %c0_i32 = arith.constant 0 : i32
    %0 = arith.cmpi eq, %arg1, %c0_i32 : i32
    %1 = arith.extui %0 : i1 to i32
    %c0_i32_0 = arith.constant 0 : i32
    %2 = arith.cmpi ne, %1, %c0_i32_0 : i32
    scf.if %2 {
      %c0_81 = arith.constant 0 : index
      %c0_82 = arith.constant 0 : index
      %c0_83 = arith.constant 0 : index
      %168 = vector.load %arg2[%c0_81, %c0_82, %c0_83] : memref<1x8x1xi32, #tpu.memory_space<vmem>>, vector<1x8x1xi32>
      %169 = vector.shape_cast %168 : vector<1x8x1xi32> to vector<8x1xi32>
      %170 = tpu.iota {dimensions = array<i32: 1>} : vector<8x17xi32>
      %171 = vector.broadcast %169 : vector<8x1xi32> to vector<8x17xi32>
      %172 = arith.cmpi eq, %170, %171 : vector<8x17xi32>
      %173 = arith.extui %172 : vector<8x17xi1> to vector<8x17xi32>
      %174 = arith.sitofp %173 : vector<8x17xi32> to vector<8x17xf32>
      %c0_84 = arith.constant 0 : index
      %c0_85 = arith.constant 0 : index
      %175 = vector.load %arg5[%c0_84, %c0_85] : memref<17x32xf32, #tpu.memory_space<vmem>>, vector<17x32xf32>
      %cst_86 = arith.constant dense<0.000000e+00> : vector<8x32xf32>
      %176 = tpu.matmul %174, %175, %cst_86 {dimension_numbers = #tpu.dot_dimension_numbers<[1], [0], [0], [1], [0, 0, 1, 1], [], []>} : vector<8x17xf32>, vector<17x32xf32>, vector<8x32xf32> -> vector<8x32xf32>
      %c0_87 = arith.constant 0 : index
      %c0_88 = arith.constant 0 : index
      %c0_89 = arith.constant 0 : index
      %177 = vector.load %arg3[%c0_87, %c0_88, %c0_89] : memref<1x8x1xi32, #tpu.memory_space<vmem>>, vector<1x8x1xi32>
      %178 = vector.shape_cast %177 : vector<1x8x1xi32> to vector<8x1xi32>
      %179 = tpu.iota {dimensions = array<i32: 1>} : vector<8x17xi32>
      %180 = vector.broadcast %178 : vector<8x1xi32> to vector<8x17xi32>
      %181 = arith.cmpi eq, %179, %180 : vector<8x17xi32>
      %182 = arith.extui %181 : vector<8x17xi1> to vector<8x17xi32>
      %183 = arith.sitofp %182 : vector<8x17xi32> to vector<8x17xf32>
      %c0_90 = arith.constant 0 : index
      %c0_91 = arith.constant 0 : index
      %184 = vector.load %arg6[%c0_90, %c0_91] : memref<17x32xf32, #tpu.memory_space<vmem>>, vector<17x32xf32>
      %cst_92 = arith.constant dense<0.000000e+00> : vector<8x32xf32>
      %185 = tpu.matmul %183, %184, %cst_92 {dimension_numbers = #tpu.dot_dimension_numbers<[1], [0], [0], [1], [0, 0, 1, 1], [], []>} : vector<8x17xf32>, vector<17x32xf32>, vector<8x32xf32> -> vector<8x32xf32>
      %186 = arith.addf %176, %185 : vector<8x32xf32>
      %c0_93 = arith.constant 0 : index
      %c0_94 = arith.constant 0 : index
      %c0_95 = arith.constant 0 : index
      %187 = vector.load %arg4[%c0_93, %c0_94, %c0_95] : memref<1x8x1xi32, #tpu.memory_space<vmem>>, vector<1x8x1xi32>
      %188 = vector.shape_cast %187 : vector<1x8x1xi32> to vector<8x1xi32>
      %189 = tpu.iota {dimensions = array<i32: 1>} : vector<8x17xi32>
      %190 = vector.broadcast %188 : vector<8x1xi32> to vector<8x17xi32>
      %191 = arith.cmpi eq, %189, %190 : vector<8x17xi32>
      %192 = arith.extui %191 : vector<8x17xi1> to vector<8x17xi32>
      %193 = arith.sitofp %192 : vector<8x17xi32> to vector<8x17xf32>
      %c0_96 = arith.constant 0 : index
      %c0_97 = arith.constant 0 : index
      %194 = vector.load %arg7[%c0_96, %c0_97] : memref<17x32xf32, #tpu.memory_space<vmem>>, vector<17x32xf32>
      %cst_98 = arith.constant dense<0.000000e+00> : vector<8x32xf32>
      %195 = tpu.matmul %193, %194, %cst_98 {dimension_numbers = #tpu.dot_dimension_numbers<[1], [0], [0], [1], [0, 0, 1, 1], [], []>} : vector<8x17xf32>, vector<17x32xf32>, vector<8x32xf32> -> vector<8x32xf32>
      %196 = arith.addf %186, %195 : vector<8x32xf32>
      %c0_99 = arith.constant 0 : index
      %c0_100 = arith.constant 0 : index
      %197 = vector.load %arg8[%c0_99, %c0_100] : memref<8x32xf32, #tpu.memory_space<vmem>>, vector<8x32xf32>
      %198 = arith.addf %196, %197 : vector<8x32xf32>
      %c0_101 = arith.constant 0 : index
      %c0_102 = arith.constant 0 : index
      %199 = vector.load %arg22[%c0_101, %c0_102] : memref<8x32xf32, #tpu.memory_space<vmem>>, vector<8x32xf32>
      tpu.vector_store %arg22[%c0_101, %c0_102], %198 {strides = array<i32>} : memref<8x32xf32, #tpu.memory_space<vmem>>, vector<8x32xf32>,
    } else {
    }
    %c0 = arith.constant 0 : index
    %c0_1 = arith.constant 0 : index
    %3 = vector.load %arg22[%c0, %c0_1] : memref<8x32xf32, #tpu.memory_space<vmem>>, vector<8x32xf32>
    %4 = arith.truncf %3 : vector<8x32xf32> to vector<8x32xbf16>
    %c0_2 = arith.constant 0 : index
    %c0_3 = arith.constant 0 : index
    %c0_4 = arith.constant 0 : index
    %5 = vector.load %arg9[%c0_2, %c0_3, %c0_4] : memref<1x32x96xbf16, #tpu.memory_space<vmem>>, vector<1x32x96xbf16>
    %6 = vector.shape_cast %5 : vector<1x32x96xbf16> to vector<32x96xbf16>
    %cst = arith.constant dense<0.000000e+00> : vector<8x96xf32>
    %7 = tpu.matmul %4, %6, %cst {dimension_numbers = #tpu.dot_dimension_numbers<[1], [0], [0], [1], [0, 0, 1, 1], [], []>} : vector<8x32xbf16>, vector<32x96xbf16>, vector<8x96xf32> -> vector<8x96xf32>
    %c0_5 = arith.constant 0 : index
    %c0_6 = arith.constant 0 : index
    %c0_7 = arith.constant 0 : index
    %8 = vector.load %arg10[%c0_5, %c0_6, %c0_7] : memref<1x1x96xf32, #tpu.memory_space<vmem>>, vector<1x1x96xf32>
    %9 = vector.shape_cast %8 : vector<1x1x96xf32> to vector<1x96xf32>
    %10 = vector.broadcast %9 : vector<1x96xf32> to vector<8x96xf32>
    %11 = arith.addf %7, %10 : vector<8x96xf32>
    %12 = arith.truncf %11 : vector<8x96xf32> to vector<8x96xbf16>
    %13 = vector.extract_strided_slice %12 {offsets = [0, 0], sizes = [8, 32], strides = [1, 1]} : vector<8x96xbf16> to vector<8x32xbf16>
    %14 = vector.extract_strided_slice %12 {offsets = [0, 32], sizes = [8, 32], strides = [1, 1]} : vector<8x96xbf16> to vector<8x32xbf16>
    %15 = vector.extract_strided_slice %12 {offsets = [0, 64], sizes = [8, 32], strides = [1, 1]} : vector<8x96xbf16> to vector<8x32xbf16>
    %c0_8 = arith.constant 0 : index
    %c0_9 = arith.constant 0 : index
    %c0_10 = arith.constant 0 : index
    %16 = vector.load %arg11[%c0_8, %c0_9, %c0_10] : memref<1x32x32xbf16, #tpu.memory_space<vmem>>, vector<1x32x32xbf16>
    %17 = vector.shape_cast %16 : vector<1x32x32xbf16> to vector<32x32xbf16>
    %cst_11 = arith.constant 0.000000e+00 : f32
    %18 = vector.broadcast %cst_11 : f32 to vector<8x32xf32>
    %19 = vector.extract_strided_slice %13 {offsets = [0, 0], sizes = [8, 16], strides = [1, 1]} : vector<8x32xbf16> to vector<8x16xbf16>
    %20 = vector.extract_strided_slice %14 {offsets = [0, 0], sizes = [8, 16], strides = [1, 1]} : vector<8x32xbf16> to vector<8x16xbf16>
    %cst_12 = arith.constant dense<0.000000e+00> : vector<8x8xf32>
    %21 = tpu.matmul %19, %20, %cst_12 {dimension_numbers = #tpu.dot_dimension_numbers<[1], [1], [0], [0], [0, 0, 1, 0], [], []>} : vector<8x16xbf16>, vector<8x16xbf16>, vector<8x8xf32> -> vector<8x8xf32>
    %cst_13 = arith.constant 2.500000e-01 : f32
    %22 = vector.broadcast %cst_13 : f32 to vector<8x8xf32>
    %23 = arith.mulf %21, %22 : vector<8x8xf32>
    %cst_14 = arith.constant dense<0xFF800000> : vector<8xf32>
    %24 = vector.multi_reduction <maximumf>, %23, %cst_14 [1] : vector<8x8xf32> to vector<8xf32>
    %25 = vector.shape_cast %24 : vector<8xf32> to vector<8x1xf32>
    %26 = vector.broadcast %25 : vector<8x1xf32> to vector<8x8xf32>
    %27 = arith.subf %23, %26 : vector<8x8xf32>
    %28 = math.exp %27 : vector<8x8xf32>
    %cst_15 = arith.constant dense<0.000000e+00> : vector<8xf32>
    %29 = vector.multi_reduction <add>, %28, %cst_15 [1] : vector<8x8xf32> to vector<8xf32>
    %30 = vector.shape_cast %29 : vector<8xf32> to vector<8x1xf32>
    %31 = tpu.reciprocal %30 {approx = true} : vector<8x1xf32> -> vector<8x1xf32>
    %32 = vector.broadcast %31 : vector<8x1xf32> to vector<8x8xf32>
    %33 = arith.mulf %28, %32 : vector<8x8xf32>
    %34 = arith.truncf %33 : vector<8x8xf32> to vector<8x8xbf16>
    %35 = vector.extract_strided_slice %15 {offsets = [0, 0], sizes = [8, 16], strides = [1, 1]} : vector<8x32xbf16> to vector<8x16xbf16>
    %cst_16 = arith.constant dense<0.000000e+00> : vector<8x16xf32>
    %36 = tpu.matmul %34, %35, %cst_16 {dimension_numbers = #tpu.dot_dimension_numbers<[1], [0], [0], [1], [0, 0, 1, 1], [], []>} : vector<8x8xbf16>, vector<8x16xbf16>, vector<8x16xf32> -> vector<8x16xf32>
    %37 = arith.truncf %36 : vector<8x16xf32> to vector<8x16xbf16>
    %38 = vector.extract_strided_slice %17 {offsets = [0, 0], sizes = [16, 32], strides = [1, 1]} : vector<32x32xbf16> to vector<16x32xbf16>
    %cst_17 = arith.constant dense<0.000000e+00> : vector<8x32xf32>
    %39 = tpu.matmul %37, %38, %cst_17 {dimension_numbers = #tpu.dot_dimension_numbers<[1], [0], [0], [1], [0, 0, 1, 1], [], []>} : vector<8x16xbf16>, vector<16x32xbf16>, vector<8x32xf32> -> vector<8x32xf32>
    %40 = arith.addf %18, %39 : vector<8x32xf32>
    %41 = vector.extract_strided_slice %13 {offsets = [0, 16], sizes = [8, 16], strides = [1, 1]} : vector<8x32xbf16> to vector<8x16xbf16>
    %42 = vector.extract_strided_slice %14 {offsets = [0, 16], sizes = [8, 16], strides = [1, 1]} : vector<8x32xbf16> to vector<8x16xbf16>
    %cst_18 = arith.constant dense<0.000000e+00> : vector<8x8xf32>
    %43 = tpu.matmul %41, %42, %cst_18 {dimension_numbers = #tpu.dot_dimension_numbers<[1], [1], [0], [0], [0, 0, 1, 0], [], []>} : vector<8x16xbf16>, vector<8x16xbf16>, vector<8x8xf32> -> vector<8x8xf32>
    %cst_19 = arith.constant 2.500000e-01 : f32
    %44 = vector.broadcast %cst_19 : f32 to vector<8x8xf32>
    %45 = arith.mulf %43, %44 : vector<8x8xf32>
    %cst_20 = arith.constant dense<0xFF800000> : vector<8xf32>
    %46 = vector.multi_reduction <maximumf>, %45, %cst_20 [1] : vector<8x8xf32> to vector<8xf32>
    %47 = vector.shape_cast %46 : vector<8xf32> to vector<8x1xf32>
    %48 = vector.broadcast %47 : vector<8x1xf32> to vector<8x8xf32>
    %49 = arith.subf %45, %48 : vector<8x8xf32>
    %50 = math.exp %49 : vector<8x8xf32>
    %cst_21 = arith.constant dense<0.000000e+00> : vector<8xf32>
    %51 = vector.multi_reduction <add>, %50, %cst_21 [1] : vector<8x8xf32> to vector<8xf32>
    %52 = vector.shape_cast %51 : vector<8xf32> to vector<8x1xf32>
    %53 = tpu.reciprocal %52 {approx = true} : vector<8x1xf32> -> vector<8x1xf32>
    %54 = vector.broadcast %53 : vector<8x1xf32> to vector<8x8xf32>
    %55 = arith.mulf %50, %54 : vector<8x8xf32>
    %56 = arith.truncf %55 : vector<8x8xf32> to vector<8x8xbf16>
    %57 = vector.extract_strided_slice %15 {offsets = [0, 16], sizes = [8, 16], strides = [1, 1]} : vector<8x32xbf16> to vector<8x16xbf16>
    %cst_22 = arith.constant dense<0.000000e+00> : vector<8x16xf32>
    %58 = tpu.matmul %56, %57, %cst_22 {dimension_numbers = #tpu.dot_dimension_numbers<[1], [0], [0], [1], [0, 0, 1, 1], [], []>} : vector<8x8xbf16>, vector<8x16xbf16>, vector<8x16xf32> -> vector<8x16xf32>
    %59 = arith.truncf %58 : vector<8x16xf32> to vector<8x16xbf16>
    %60 = vector.extract_strided_slice %17 {offsets = [16, 0], sizes = [16, 32], strides = [1, 1]} : vector<32x32xbf16> to vector<16x32xbf16>
    %cst_23 = arith.constant dense<0.000000e+00> : vector<8x32xf32>
    %61 = tpu.matmul %59, %60, %cst_23 {dimension_numbers = #tpu.dot_dimension_numbers<[1], [0], [0], [1], [0, 0, 1, 1], [], []>} : vector<8x16xbf16>, vector<16x32xbf16>, vector<8x32xf32> -> vector<8x32xf32>
    %62 = arith.addf %40, %61 : vector<8x32xf32>
    %c0_24 = arith.constant 0 : index
    %c0_25 = arith.constant 0 : index
    %c0_26 = arith.constant 0 : index
    %63 = vector.load %arg12[%c0_24, %c0_25, %c0_26] : memref<1x1x32xf32, #tpu.memory_space<vmem>>, vector<1x1x32xf32>
    %64 = vector.shape_cast %63 : vector<1x1x32xf32> to vector<1x32xf32>
    %65 = vector.broadcast %64 : vector<1x32xf32> to vector<8x32xf32>
    %66 = arith.addf %62, %65 : vector<8x32xf32>
    %67 = arith.addf %3, %66 : vector<8x32xf32>
    %c0_27 = arith.constant 0 : index
    %c0_28 = arith.constant 0 : index
    %c0_29 = arith.constant 0 : index
    %68 = vector.load %arg13[%c0_27, %c0_28, %c0_29] : memref<1x1x32xf32, #tpu.memory_space<vmem>>, vector<1x1x32xf32>
    %69 = vector.shape_cast %68 : vector<1x1x32xf32> to vector<1x32xf32>
    %c0_30 = arith.constant 0 : index
    %c0_31 = arith.constant 0 : index
    %c0_32 = arith.constant 0 : index
    %70 = vector.load %arg14[%c0_30, %c0_31, %c0_32] : memref<1x1x32xf32, #tpu.memory_space<vmem>>, vector<1x1x32xf32>
    %71 = vector.shape_cast %70 : vector<1x1x32xf32> to vector<1x32xf32>
    %cst_33 = arith.constant dense<0.000000e+00> : vector<8xf32>
    %72 = vector.multi_reduction <add>, %67, %cst_33 [1] : vector<8x32xf32> to vector<8xf32>
    %73 = vector.shape_cast %72 : vector<8xf32> to vector<8x1xf32>
    %cst_34 = arith.constant 3.200000e+01 : f32
    %74 = vector.broadcast %cst_34 : f32 to vector<8x1xf32>
    %75 = arith.divf %73, %74 : vector<8x1xf32>
    %76 = vector.broadcast %75 : vector<8x1xf32> to vector<8x32xf32>
    %77 = arith.subf %67, %76 : vector<8x32xf32>
    %78 = arith.mulf %77, %77 : vector<8x32xf32>
    %cst_35 = arith.constant dense<0.000000e+00> : vector<8xf32>
    %79 = vector.multi_reduction <add>, %78, %cst_35 [1] : vector<8x32xf32> to vector<8xf32>
    %80 = vector.shape_cast %79 : vector<8xf32> to vector<8x1xf32>
    %cst_36 = arith.constant 3.200000e+01 : f32
    %81 = vector.broadcast %cst_36 : f32 to vector<8x1xf32>
    %82 = arith.divf %80, %81 : vector<8x1xf32>
    %83 = vector.broadcast %75 : vector<8x1xf32> to vector<8x32xf32>
    %84 = arith.subf %67, %83 : vector<8x32xf32>
    %cst_37 = arith.constant 9.99999974E-6 : f32
    %85 = vector.broadcast %cst_37 : f32 to vector<8x1xf32>
    %86 = arith.addf %82, %85 : vector<8x1xf32>
    %87 = math.rsqrt %86 : vector<8x1xf32>
    %88 = vector.broadcast %87 : vector<8x1xf32> to vector<8x32xf32>
    %89 = arith.mulf %84, %88 : vector<8x32xf32>
    %90 = vector.broadcast %69 : vector<1x32xf32> to vector<8x32xf32>
    %91 = arith.mulf %89, %90 : vector<8x32xf32>
    %92 = vector.broadcast %71 : vector<1x32xf32> to vector<8x32xf32>
    %93 = arith.addf %91, %92 : vector<8x32xf32>
    %94 = tpu.iota {dimensions = array<i32: 0>} : vector<8x1xi32>
    %c0_i32_38 = arith.constant 0 : i32
    %95 = vector.broadcast %c0_i32_38 : i32 to vector<8x1xi32>
    %96 = arith.cmpi eq, %94, %95 : vector<8x1xi32>
    %c1_i32 = arith.constant 1 : i32
    %97 = tpu.dynamic_rotate %93 by %c1_i32 dim 0 : vector<8x32xf32>, i32 -> vector<8x32xf32>
    %cst_39 = arith.constant 0.000000e+00 : f32
    %98 = vector.shape_cast %96 : vector<8x1xi1> to vector<8x1xi1>
    %99 = vector.broadcast %98 : vector<8x1xi1> to vector<8x32xi1>
    %100 = vector.broadcast %cst_39 : f32 to vector<8x32xf32>
    %101 = arith.select %99, %100, %97 : vector<8x32xi1>, vector<8x32xf32>
    %c7_i32 = arith.constant 7 : i32
    %102 = vector.broadcast %c7_i32 : i32 to vector<8x1xi32>
    %103 = arith.cmpi eq, %94, %102 : vector<8x1xi32>
    %c7_i32_40 = arith.constant 7 : i32
    %104 = tpu.dynamic_rotate %93 by %c7_i32_40 dim 0 : vector<8x32xf32>, i32 -> vector<8x32xf32>
    %cst_41 = arith.constant 0.000000e+00 : f32
    %105 = vector.shape_cast %103 : vector<8x1xi1> to vector<8x1xi1>
    %106 = vector.broadcast %105 : vector<8x1xi1> to vector<8x32xi1>
    %107 = vector.broadcast %cst_41 : f32 to vector<8x32xf32>
    %108 = arith.select %106, %107, %104 : vector<8x32xi1>, vector<8x32xf32>
    %109 = arith.truncf %101 : vector<8x32xf32> to vector<8x32xbf16>
    %c0_42 = arith.constant 0 : index
    %c0_43 = arith.constant 0 : index
    %c0_44 = arith.constant 0 : index
    %c0_45 = arith.constant 0 : index
    %110 = vector.load %arg15[%c0_42, %c0_43, %c0_44, %c0_45] : memref<1x3x32x32xbf16, #tpu.memory_space<vmem>>, vector<1x1x32x32xbf16>
    %111 = vector.shape_cast %110 : vector<1x1x32x32xbf16> to vector<32x32xbf16>
    %cst_46 = arith.constant dense<0.000000e+00> : vector<8x32xf32>
    %112 = tpu.matmul %109, %111, %cst_46 {dimension_numbers = #tpu.dot_dimension_numbers<[1], [0], [0], [1], [0, 0, 1, 1], [], []>} : vector<8x32xbf16>, vector<32x32xbf16>, vector<8x32xf32> -> vector<8x32xf32>
    %113 = arith.truncf %93 : vector<8x32xf32> to vector<8x32xbf16>
    %c0_47 = arith.constant 0 : index
    %c1 = arith.constant 1 : index
    %c0_48 = arith.constant 0 : index
    %c0_49 = arith.constant 0 : index
    %114 = vector.load %arg15[%c0_47, %c1, %c0_48, %c0_49] : memref<1x3x32x32xbf16, #tpu.memory_space<vmem>>, vector<1x1x32x32xbf16>
    %115 = vector.shape_cast %114 : vector<1x1x32x32xbf16> to vector<32x32xbf16>
    %cst_50 = arith.constant dense<0.000000e+00> : vector<8x32xf32>
    %116 = tpu.matmul %113, %115, %cst_50 {dimension_numbers = #tpu.dot_dimension_numbers<[1], [0], [0], [1], [0, 0, 1, 1], [], []>} : vector<8x32xbf16>, vector<32x32xbf16>, vector<8x32xf32> -> vector<8x32xf32>
    %117 = arith.addf %112, %116 : vector<8x32xf32>
    %118 = arith.truncf %108 : vector<8x32xf32> to vector<8x32xbf16>
    %c0_51 = arith.constant 0 : index
    %c2 = arith.constant 2 : index
    %c0_52 = arith.constant 0 : index
    %c0_53 = arith.constant 0 : index
    %119 = vector.load %arg15[%c0_51, %c2, %c0_52, %c0_53] : memref<1x3x32x32xbf16, #tpu.memory_space<vmem>>, vector<1x1x32x32xbf16>
    %120 = vector.shape_cast %119 : vector<1x1x32x32xbf16> to vector<32x32xbf16>
    %cst_54 = arith.constant dense<0.000000e+00> : vector<8x32xf32>
    %121 = tpu.matmul %118, %120, %cst_54 {dimension_numbers = #tpu.dot_dimension_numbers<[1], [0], [0], [1], [0, 0, 1, 1], [], []>} : vector<8x32xbf16>, vector<32x32xbf16>, vector<8x32xf32> -> vector<8x32xf32>
    %122 = arith.addf %117, %121 : vector<8x32xf32>
    %c0_55 = arith.constant 0 : index
    %c0_56 = arith.constant 0 : index
    %c0_57 = arith.constant 0 : index
    %123 = vector.load %arg16[%c0_55, %c0_56, %c0_57] : memref<1x1x32xf32, #tpu.memory_space<vmem>>, vector<1x1x32xf32>
    %124 = vector.shape_cast %123 : vector<1x1x32xf32> to vector<1x32xf32>
    %125 = vector.broadcast %124 : vector<1x32xf32> to vector<8x32xf32>
    %126 = arith.addf %122, %125 : vector<8x32xf32>
    %cst_58 = arith.constant 0.000000e+00 : f32
    %127 = vector.broadcast %cst_58 : f32 to vector<8x32xf32>
    %128 = arith.maximumf %126, %127 : vector<8x32xf32>
    %129 = arith.truncf %128 : vector<8x32xf32> to vector<8x32xbf16>
    %c0_59 = arith.constant 0 : index
    %c0_60 = arith.constant 0 : index
    %c0_61 = arith.constant 0 : index
    %130 = vector.load %arg17[%c0_59, %c0_60, %c0_61] : memref<1x32x32xbf16, #tpu.memory_space<vmem>>, vector<1x32x32xbf16>
    %131 = vector.shape_cast %130 : vector<1x32x32xbf16> to vector<32x32xbf16>
    %cst_62 = arith.constant dense<0.000000e+00> : vector<8x32xf32>
    %132 = tpu.matmul %129, %131, %cst_62 {dimension_numbers = #tpu.dot_dimension_numbers<[1], [0], [0], [1], [0, 0, 1, 1], [], []>} : vector<8x32xbf16>, vector<32x32xbf16>, vector<8x32xf32> -> vector<8x32xf32>
    %c0_63 = arith.constant 0 : index
    %c0_64 = arith.constant 0 : index
    %c0_65 = arith.constant 0 : index
    %133 = vector.load %arg18[%c0_63, %c0_64, %c0_65] : memref<1x1x32xf32, #tpu.memory_space<vmem>>, vector<1x1x32xf32>
    %134 = vector.shape_cast %133 : vector<1x1x32xf32> to vector<1x32xf32>
    %135 = vector.broadcast %134 : vector<1x32xf32> to vector<8x32xf32>
    %136 = arith.addf %132, %135 : vector<8x32xf32>
    %137 = arith.addf %93, %136 : vector<8x32xf32>
    %c0_66 = arith.constant 0 : index
    %c0_67 = arith.constant 0 : index
    %c0_68 = arith.constant 0 : index
    %138 = vector.load %arg19[%c0_66, %c0_67, %c0_68] : memref<1x1x32xf32, #tpu.memory_space<vmem>>, vector<1x1x32xf32>
    %139 = vector.shape_cast %138 : vector<1x1x32xf32> to vector<1x32xf32>
    %c0_69 = arith.constant 0 : index
    %c0_70 = arith.constant 0 : index
    %c0_71 = arith.constant 0 : index
    %140 = vector.load %arg20[%c0_69, %c0_70, %c0_71] : memref<1x1x32xf32, #tpu.memory_space<vmem>>, vector<1x1x32xf32>
    %141 = vector.shape_cast %140 : vector<1x1x32xf32> to vector<1x32xf32>
    %cst_72 = arith.constant dense<0.000000e+00> : vector<8xf32>
    %142 = vector.multi_reduction <add>, %137, %cst_72 [1] : vector<8x32xf32> to vector<8xf32>
    %143 = vector.shape_cast %142 : vector<8xf32> to vector<8x1xf32>
    %cst_73 = arith.constant 3.200000e+01 : f32
    %144 = vector.broadcast %cst_73 : f32 to vector<8x1xf32>
    %145 = arith.divf %143, %144 : vector<8x1xf32>
    %146 = vector.broadcast %145 : vector<8x1xf32> to vector<8x32xf32>
    %147 = arith.subf %137, %146 : vector<8x32xf32>
    %148 = arith.mulf %147, %147 : vector<8x32xf32>
    %cst_74 = arith.constant dense<0.000000e+00> : vector<8xf32>
    %149 = vector.multi_reduction <add>, %148, %cst_74 [1] : vector<8x32xf32> to vector<8xf32>
    %150 = vector.shape_cast %149 : vector<8xf32> to vector<8x1xf32>
    %cst_75 = arith.constant 3.200000e+01 : f32
    %151 = vector.broadcast %cst_75 : f32 to vector<8x1xf32>
    %152 = arith.divf %150, %151 : vector<8x1xf32>
    %153 = vector.broadcast %145 : vector<8x1xf32> to vector<8x32xf32>
    %154 = arith.subf %137, %153 : vector<8x32xf32>
    %cst_76 = arith.constant 9.99999974E-6 : f32
    %155 = vector.broadcast %cst_76 : f32 to vector<8x1xf32>
    %156 = arith.addf %152, %155 : vector<8x1xf32>
    %157 = math.rsqrt %156 : vector<8x1xf32>
    %158 = vector.broadcast %157 : vector<8x1xf32> to vector<8x32xf32>
    %159 = arith.mulf %154, %158 : vector<8x32xf32>
    %160 = vector.broadcast %139 : vector<1x32xf32> to vector<8x32xf32>
    %161 = arith.mulf %159, %160 : vector<8x32xf32>
    %162 = vector.broadcast %141 : vector<1x32xf32> to vector<8x32xf32>
    %163 = arith.addf %161, %162 : vector<8x32xf32>
    %c0_77 = arith.constant 0 : index
    %c0_78 = arith.constant 0 : index
    %164 = vector.load %arg22[%c0_77, %c0_78] : memref<8x32xf32, #tpu.memory_space<vmem>>, vector<8x32xf32>
    tpu.vector_store %arg22[%c0_77, %c0_78], %163 {strides = array<i32>} : memref<8x32xf32, #tpu.memory_space<vmem>>, vector<8x32xf32>,
    %c1_i32_79 = arith.constant 1 : i32
    %165 = arith.cmpi eq, %arg1, %c1_i32_79 : i32
    %166 = arith.extui %165 : i1 to i32
    %c0_i32_80 = arith.constant 0 : i32
    %167 = arith.cmpi ne, %166, %c0_i32_80 : i32
    scf.if %167 {
      %c0_81 = arith.constant 0 : index
      %c0_82 = arith.constant 0 : index
      %c0_83 = arith.constant 0 : index
      %168 = vector.load %arg21[%c0_81, %c0_82, %c0_83] : memref<1x8x32xf32, #tpu.memory_space<vmem>>, vector<1x8x32xf32>
      %169 = vector.shape_cast %168 : vector<1x8x32xf32> to vector<8x32xf32>
      %170 = vector.shape_cast %163 : vector<8x32xf32> to vector<1x8x32xf32>
      tpu.vector_store %arg21[%c0_81, %c0_82, %c0_83], %170 {strides = array<i32>} : memref<1x8x32xf32, #tpu.memory_space<vmem>>, vector<1x8x32xf32>,
    } else {
    }
    return
  }
  func.func @transform_0(%arg0: i32, %arg1: i32) -> (i32, i32, i32) {
    %c0_i32 = arith.constant 0 : i32
    %c0_i32_0 = arith.constant 0 : i32
    %c0_i32_1 = arith.constant 0 : i32
    return %arg0, %c0_i32, %c0_i32_0 : i32, i32, i32
  }
  func.func @transform_1(%arg0: i32, %arg1: i32) -> (i32, i32, i32) {
    %c0_i32 = arith.constant 0 : i32
    %c0_i32_0 = arith.constant 0 : i32
    %c0_i32_1 = arith.constant 0 : i32
    return %arg0, %c0_i32, %c0_i32_0 : i32, i32, i32
  }
  func.func @transform_2(%arg0: i32, %arg1: i32) -> (i32, i32, i32) {
    %c0_i32 = arith.constant 0 : i32
    %c0_i32_0 = arith.constant 0 : i32
    %c0_i32_1 = arith.constant 0 : i32
    return %arg0, %c0_i32, %c0_i32_0 : i32, i32, i32
  }
  func.func @transform_3(%arg0: i32, %arg1: i32) -> (i32, i32) {
    %c0_i32 = arith.constant 0 : i32
    %c0_i32_0 = arith.constant 0 : i32
    %c0_i32_1 = arith.constant 0 : i32
    return %c0_i32, %c0_i32_0 : i32, i32
  }
  func.func @transform_4(%arg0: i32, %arg1: i32) -> (i32, i32) {
    %c0_i32 = arith.constant 0 : i32
    %c0_i32_0 = arith.constant 0 : i32
    %c0_i32_1 = arith.constant 0 : i32
    return %c0_i32, %c0_i32_0 : i32, i32
  }
  func.func @transform_5(%arg0: i32, %arg1: i32) -> (i32, i32) {
    %c0_i32 = arith.constant 0 : i32
    %c0_i32_0 = arith.constant 0 : i32
    %c0_i32_1 = arith.constant 0 : i32
    return %c0_i32, %c0_i32_0 : i32, i32
  }
  func.func @transform_6(%arg0: i32, %arg1: i32) -> (i32, i32) {
    %c0_i32 = arith.constant 0 : i32
    %c0_i32_0 = arith.constant 0 : i32
    %c0_i32_1 = arith.constant 0 : i32
    return %c0_i32, %c0_i32_0 : i32, i32
  }
  func.func @transform_7(%arg0: i32, %arg1: i32) -> (i32, i32, i32) {
    %c0_i32 = arith.constant 0 : i32
    %c0_i32_0 = arith.constant 0 : i32
    %c0_i32_1 = arith.constant 0 : i32
    return %arg1, %c0_i32, %c0_i32_0 : i32, i32, i32
  }
  func.func @transform_8(%arg0: i32, %arg1: i32) -> (i32, i32, i32) {
    %c0_i32 = arith.constant 0 : i32
    %c0_i32_0 = arith.constant 0 : i32
    %c0_i32_1 = arith.constant 0 : i32
    return %arg1, %c0_i32, %c0_i32_0 : i32, i32, i32
  }
  func.func @transform_9(%arg0: i32, %arg1: i32) -> (i32, i32, i32) {
    %c0_i32 = arith.constant 0 : i32
    %c0_i32_0 = arith.constant 0 : i32
    %c0_i32_1 = arith.constant 0 : i32
    return %arg1, %c0_i32, %c0_i32_0 : i32, i32, i32
  }
  func.func @transform_10(%arg0: i32, %arg1: i32) -> (i32, i32, i32) {
    %c0_i32 = arith.constant 0 : i32
    %c0_i32_0 = arith.constant 0 : i32
    %c0_i32_1 = arith.constant 0 : i32
    return %arg1, %c0_i32, %c0_i32_0 : i32, i32, i32
  }
  func.func @transform_11(%arg0: i32, %arg1: i32) -> (i32, i32, i32) {
    %c0_i32 = arith.constant 0 : i32
    %c0_i32_0 = arith.constant 0 : i32
    %c0_i32_1 = arith.constant 0 : i32
    return %arg1, %c0_i32, %c0_i32_0 : i32, i32, i32
  }
  func.func @transform_12(%arg0: i32, %arg1: i32) -> (i32, i32, i32) {
    %c0_i32 = arith.constant 0 : i32
    %c0_i32_0 = arith.constant 0 : i32
    %c0_i32_1 = arith.constant 0 : i32
    return %arg1, %c0_i32, %c0_i32_0 : i32, i32, i32
  }
  func.func @transform_13(%arg0: i32, %arg1: i32) -> (i32, i32, i32, i32) {
    %c0_i32 = arith.constant 0 : i32
    %c0_i32_0 = arith.constant 0 : i32
    %c0_i32_1 = arith.constant 0 : i32
    %c0_i32_2 = arith.constant 0 : i32
    return %arg1, %c0_i32, %c0_i32_0, %c0_i32_1 : i32, i32, i32, i32
  }
  func.func @transform_14(%arg0: i32, %arg1: i32) -> (i32, i32, i32) {
    %c0_i32 = arith.constant 0 : i32
    %c0_i32_0 = arith.constant 0 : i32
    %c0_i32_1 = arith.constant 0 : i32
    return %arg1, %c0_i32, %c0_i32_0 : i32, i32, i32
  }
  func.func @transform_15(%arg0: i32, %arg1: i32) -> (i32, i32, i32) {
    %c0_i32 = arith.constant 0 : i32
    %c0_i32_0 = arith.constant 0 : i32
    %c0_i32_1 = arith.constant 0 : i32
    return %arg1, %c0_i32, %c0_i32_0 : i32, i32, i32
  }
  func.func @transform_16(%arg0: i32, %arg1: i32) -> (i32, i32, i32) {
    %c0_i32 = arith.constant 0 : i32
    %c0_i32_0 = arith.constant 0 : i32
    %c0_i32_1 = arith.constant 0 : i32
    return %arg1, %c0_i32, %c0_i32_0 : i32, i32, i32
  }
  func.func @transform_17(%arg0: i32, %arg1: i32) -> (i32, i32, i32) {
    %c0_i32 = arith.constant 0 : i32
    %c0_i32_0 = arith.constant 0 : i32
    %c0_i32_1 = arith.constant 0 : i32
    return %arg1, %c0_i32, %c0_i32_0 : i32, i32, i32
  }
  func.func @transform_18(%arg0: i32, %arg1: i32) -> (i32, i32, i32) {
    %c0_i32 = arith.constant 0 : i32
    %c0_i32_0 = arith.constant 0 : i32
    %c0_i32_1 = arith.constant 0 : i32
    return %arg1, %c0_i32, %c0_i32_0 : i32, i32, i32
  }
  func.func @transform_19(%arg0: i32, %arg1: i32) -> (i32, i32, i32) {
    %c0_i32 = arith.constant 0 : i32
    %c0_i32_0 = arith.constant 0 : i32
    %c0_i32_1 = arith.constant 0 : i32
    return %arg0, %c0_i32, %c0_i32_0 : i32, i32, i32
  }
}

</mosaic_0001>

<llo_original>
// kernel: tpu_custom_call.1
$region0: #{tpu_custom_call.1}
  #allocation0 [shape = 'u32[]', space=smem, size = 0x4, offset = 0x4, fixed_abs, tag = 'smem constant byte address 0x4 - core index']
  #allocation1 [shape = 'u32[144,128]{1,0:T(1,128)}', space=vmem, size = 0x12000, scoped, tag = 'internal scratch']
  #allocation2 [shape = 'f32[8,32]{1,0:T(8,128)}', space=vmem, size = 0x1000, scoped, tag = 'scratch operand']
  %s0 = inlined_call_operand.vmem [shape: s32[2,8,1], index: 0, kind: input, shape index: {}]
  %s1 = inlined_call_operand.vmem [shape: s32[2,8,1], index: 1, kind: input, shape index: {}]
  %s2 = inlined_call_operand.vmem [shape: s32[2,8,1], index: 2, kind: input, shape index: {}]
  %s3 = inlined_call_operand.hbm [shape: f32[17,32], index: 3, kind: input, shape index: {}]
  %s4 = inlined_call_operand.hbm [shape: f32[17,32], index: 4, kind: input, shape index: {}]
  %s5 = inlined_call_operand.hbm [shape: f32[17,32], index: 5, kind: input, shape index: {}]
  %s6 = inlined_call_operand.hbm [shape: f32[8,32], index: 6, kind: input, shape index: {}]
  %s7 = inlined_call_operand.hbm [shape: bf16[2,32,96], index: 7, kind: input, shape index: {}]
  %s8 = inlined_call_operand.vmem [shape: f32[2,1,96], index: 8, kind: input, shape index: {}]
  %s9 = inlined_call_operand.hbm [shape: bf16[2,32,32], index: 9, kind: input, shape index: {}]
  %s10 = inlined_call_operand.vmem [shape: f32[2,1,32], index: 10, kind: input, shape index: {}]
  %s11 = inlined_call_operand.vmem [shape: f32[2,1,32], index: 11, kind: input, shape index: {}]
  %s12 = inlined_call_operand.hbm [shape: f32[2,1,32], index: 12, kind: input, shape index: {}]
  %s13 = inlined_call_operand.vmem [shape: bf16[2,3,32,32], index: 13, kind: input, shape index: {}]
  %s14 = inlined_call_operand.vmem [shape: f32[2,1,32], index: 14, kind: input, shape index: {}]
  %s15 = inlined_call_operand.hbm [shape: bf16[2,32,32], index: 15, kind: input, shape index: {}]
  %s16 = inlined_call_operand.vmem [shape: f32[2,1,32], index: 16, kind: input, shape index: {}]
  %s17 = inlined_call_operand.vmem [shape: f32[2,1,32], index: 17, kind: input, shape index: {}]
  %s18 = inlined_call_operand.vmem [shape: f32[2,1,32], index: 18, kind: input, shape index: {}]
  %s19 = inlined_call_operand.hbm [shape: f32[2,8,32], index: 19, kind: output, shape index: {}]
  %s20 = sld [smem:[#allocation0]]
  $region149: #{tpu_custom_call.1} parent=0
    _
  %s22 = ssub.s32 1, %s20
  %s23 = scalar_select 0, %s22, %s20
  $region1: #{tpu_custom_call.1} parent=0
    #allocation3 [shape = 'u8[12288]{0}', space=vmem, size = 0x3000, scoped, tag = 'input window, operand 3, single buffered']
    #allocation4 [shape = 's32[2]{0}', space=sflag, size = 0x8, scoped, tag = 'scoped memory for tpu_custom_call.1']
    #allocation5 [shape = 's32[2]{0}', space=sflag, size = 0x8, scoped, tag = 'scoped memory for tpu_custom_call.1']
    #allocation6 [shape = 'u8[12288]{0}', space=vmem, size = 0x3000, scoped, tag = 'input window, operand 4, single buffered']
    #allocation7 [shape = 's32[1]{0}', space=sflag, size = 0x4, scoped, tag = 'scoped memory for tpu_custom_call.1']
    #allocation8 [shape = 'u8[12288]{0}', space=vmem, size = 0x3000, scoped, tag = 'input window, operand 5, single buffered']
    #allocation9 [shape = 'u8[4096]{0}', space=vmem, size = 0x1000, scoped, tag = 'input window, operand 6, single buffered']
    #allocation10 [shape = 's32[1]{0}', space=sflag, size = 0x4, scoped, tag = 'scoped memory for tpu_custom_call.1']
    #allocation11 [shape = 'u8[16384]{0}', space=vmem, size = 0x4000, scoped, tag = 'input window, operand 7']
    #allocation12 [shape = 'u8[16384]{0}', space=vmem, size = 0x4000, scoped, tag = 'input window, operand 9']
    #allocation13 [shape = 'u8[1024]{0}', space=vmem, size = 0x400, scoped, tag = 'input window, operand 12']
    #allocation14 [shape = 'u8[16384]{0}', space=vmem, size = 0x4000, scoped, tag = 'input window, operand 15']
    #allocation15 [shape = 'u8[8192]{0}', space=vmem, size = 0x2000, scoped, tag = 'output window, operand 0']
    %24 = vsyncpa [#allocation4], 0
    %25 = vsyncpa [#allocation7], 0
    %26 = vsyncpa [#allocation10], 0
    %27 = vsyncpa [#allocation5], 0
    %s28 = scalar_lea.sflag [#allocation5], 1
    %29 = vsyncpa %s28, 0
    loop: start=0, step=1, limit=6
    $region2: #{tpu_custom_call.1} parent=1 // loop_pre_header
      _
    $region3: #{tpu_custom_call.1} parent=1 // loop_header
      %s31 = sphi 0, %s35
      %p32 = scmp.ge.s32.totalorder %s31, 6
      %s38 = sphi 0, %s50
      %s39 = sphi 0, %s46
      %s40 = sphi 0, %s38
      %s41 = sphi 0, %s39
      %s42 = sphi 0, %s40
      %s43 = sphi 0, %s41
      %s53 = sphi 0, %s55
      %s56 = sphi 0, %s53
      %s57 = sphi 0, %s56
      %s73 = sphi 0, %s57
      %s79 = sphi 0, %s81
      %s82 = sphi 0, %s79
      %s83 = sphi 0, %s82
      %s99 = sphi 0, %s83
      %s105 = sphi 0, %s107
      %s108 = sphi 0, %s105
      %s109 = sphi 0, %s108
      %s125 = sphi 0, %s109
      %s129 = sphi 0, %s129
      %s131 = sphi 0, %s129
      %s132 = sphi 0, %s131
      %s146 = sphi 0, %s132
      %s150 = sphi 0, %s150
      %s152 = sphi 0, %s150
      %s153 = sphi 0, %s152
      %s167 = sphi 0, %s153
      %s171 = sphi 0, %s171
      %s173 = sphi 0, %s171
      %s174 = sphi 0, %s173
      %s188 = sphi 0, %s174
      %s192 = sphi 0, %s192
      %s194 = sphi 0, %s192
      %s195 = sphi 0, %s194
      %s209 = sphi 0, %s195
      %s215 = sphi 0, %s217
      %s218 = sphi 0, %s215
      %s219 = sphi 0, %s218
      %s235 = sphi 0, %s219
      %s241 = sphi 0, %s243
      %s244 = sphi 0, %s241
      %s245 = sphi 0, %s244
      %s261 = sphi 0, %s245
      %s267 = sphi 0, %s269
      %s270 = sphi 0, %s267
      %s271 = sphi 0, %s270
      %s287 = sphi 0, %s271
      %s293 = sphi 0, %s295
      %s296 = sphi 0, %s293
      %s297 = sphi 0, %s296
      %s313 = sphi 0, %s297
      %s319 = sphi 0, %s321
      %s322 = sphi 0, %s319
      %s323 = sphi 0, %s322
      %s339 = sphi 0, %s323
      %s345 = sphi 0, %s347
      %s348 = sphi 0, %s345
      %s349 = sphi 0, %s348
      %s365 = sphi 0, %s349
      %s371 = sphi 0, %s373
      %s374 = sphi 0, %s371
      %s375 = sphi 0, %s374
      %s391 = sphi 0, %s375
      %s397 = sphi 0, %s399
      %s400 = sphi 0, %s397
      %s401 = sphi 0, %s400
      %s417 = sphi 0, %s401
      %s423 = sphi 0, %s425
      %s426 = sphi 0, %s423
      %s427 = sphi 0, %s426
      %s443 = sphi 0, %s427
      %s449 = sphi 0, %s451
      %s452 = sphi 0, %s449
      %s453 = sphi 0, %s452
      %s469 = sphi 0, %s453
      %s475 = sphi 0, %s477
      %s478 = sphi 0, %s475
      %s479 = sphi 0, %s478
      %s495 = sphi 0, %s479
      %s501 = sphi 0, %s503
      %s504 = sphi 0, %s501
      %s505 = sphi 0, %s504
      %s521 = sphi 0, %s505
      %s527 = sphi 0, %s529
      %s530 = sphi 0, %s527
      %s531 = sphi 0, %s530
      %s547 = sphi 0, %s531
    $region4: #{tpu_custom_call.1} parent=1 // loop_header_branch
      %34 = sbr.rel (%p32) target = $region8
    $region5: #{tpu_custom_call.1} parent=1 // loop_body
      %s36 = ssub.s32 %s31, 1
      %s37 = ssub.s32 %s31, 2
      %s44 = sadd.s32 1, %s39
      %p45 = scmp.ge.s32.totalorder %s44, 2
      %s46 = scalar_select %p45, 0, %s44
      %s47 = sadd.s32 1, %s38
      %s48 = scalar_select %p45, %s47, %s38
      %p49 = scmp.ge.s32.totalorder %s48, 2
      %s50 = scalar_select %p49, 0, %s48
      %s51 = ssub.s32 %s38, %s50
      %p52 = scmp.eq.s32.totalorder %s51, 0
      %s54 = sadd.s32 %s53, 1
      %s55 = scalar_select %p52, %s53, %s54
      %p58 = pneg %p52
      %p59 = scmp.eq.s32.totalorder %s31, 3
      %p60 = por %p58, %p59
      %p61 = scmp.ne.s32.totalorder %s53, %s56
      %p62 = scmp.eq.s32.totalorder %s31, 0
      %p63 = por %p61, %p62
      %p64 = scmp.ne.s32.totalorder %s53, %s56
      %p65 = scmp.eq.s32.totalorder %s36, 3
      %p66 = por %p64, %p65
      %p67 = scmp.ne.s32.totalorder %s56, %s57
      %p68 = scmp.eq.s32.totalorder %s36, 0
      %p69 = por %p67, %p68
      %p70 = scmp.ne.s32.totalorder %s56, %s57
      %p71 = scmp.eq.s32.totalorder %s37, 3
      %p72 = por %p70, %p71
      %p74 = scmp.ne.s32.totalorder %s57, %s73
      %p75 = scmp.eq.s32.totalorder %s37, 0
      %p76 = por %p74, %p75
      %s77 = ssub.s32 %s38, %s50
      %p78 = scmp.eq.s32.totalorder %s77, 0
      %s80 = sadd.s32 %s79, 1
      %s81 = scalar_select %p78, %s79, %s80
      %p84 = pneg %p78
      %p85 = scmp.eq.s32.totalorder %s31, 3
      %p86 = por %p84, %p85
      %p87 = scmp.ne.s32.totalorder %s79, %s82
      %p88 = scmp.eq.s32.totalorder %s31, 0
      %p89 = por %p87, %p88
      %p90 = scmp.ne.s32.totalorder %s79, %s82
      %p91 = scmp.eq.s32.totalorder %s36, 3
      %p92 = por %p90, %p91
      %p93 = scmp.ne.s32.totalorder %s82, %s83
      %p94 = scmp.eq.s32.totalorder %s36, 0
      %p95 = por %p93, %p94
      %p96 = scmp.ne.s32.totalorder %s82, %s83
      %p97 = scmp.eq.s32.totalorder %s37, 3
      %p98 = por %p96, %p97
      %p100 = scmp.ne.s32.totalorder %s83, %s99
      %p101 = scmp.eq.s32.totalorder %s37, 0
      %p102 = por %p100, %p101
      %s103 = ssub.s32 %s38, %s50
      %p104 = scmp.eq.s32.totalorder %s103, 0
      %s106 = sadd.s32 %s105, 1
      %s107 = scalar_select %p104, %s105, %s106
      %p110 = pneg %p104
      %p111 = scmp.eq.s32.totalorder %s31, 3
      %p112 = por %p110, %p111
      %p113 = scmp.ne.s32.totalorder %s105, %s108
      %p114 = scmp.eq.s32.totalorder %s31, 0
      %p115 = por %p113, %p114
      %p116 = scmp.ne.s32.totalorder %s105, %s108
      %p117 = scmp.eq.s32.totalorder %s36, 3
      %p118 = por %p116, %p117
      %p119 = scmp.ne.s32.totalorder %s108, %s109
      %p120 = scmp.eq.s32.totalorder %s36, 0
      %p121 = por %p119, %p120
      %p122 = scmp.ne.s32.totalorder %s108, %s109
      %p123 = scmp.eq.s32.totalorder %s37, 3
      %p124 = por %p122, %p123
      %p126 = scmp.ne.s32.totalorder %s109, %s125
      %p127 = scmp.eq.s32.totalorder %s37, 0
      %p128 = por %p126, %p127
      %s130 = sadd.s32 %s129, 1
      %p133 = scmp.eq.s32.totalorder %s31, 3
      %p134 = scmp.ne.s32.totalorder %s129, %s131
      %p135 = scmp.eq.s32.totalorder %s31, 0
      %p136 = por %p134, %p135
      %p137 = scmp.ne.s32.totalorder %s129, %s131
      %p138 = scmp.eq.s32.totalorder %s36, 3
      %p139 = por %p137, %p138
      %p140 = scmp.ne.s32.totalorder %s131, %s132
      %p141 = scmp.eq.s32.totalorder %s36, 0
      %p142 = por %p140, %p141
      %p143 = scmp.ne.s32.totalorder %s131, %s132
      %p144 = scmp.eq.s32.totalorder %s37, 3
      %p145 = por %p143, %p144
      %p147 = scmp.ne.s32.totalorder %s132, %s146
      %p148 = scmp.eq.s32.totalorder %s37, 0
      %p149 = por %p147, %p148
      %s151 = sadd.s32 %s150, 1
      %p154 = scmp.eq.s32.totalorder %s31, 3
      %p155 = scmp.ne.s32.totalorder %s150, %s152
      %p156 = scmp.eq.s32.totalorder %s31, 0
      %p157 = por %p155, %p156
      %p158 = scmp.ne.s32.totalorder %s150, %s152
      %p159 = scmp.eq.s32.totalorder %s36, 3
      %p160 = por %p158, %p159
      %p161 = scmp.ne.s32.totalorder %s152, %s153
      %p162 = scmp.eq.s32.totalorder %s36, 0
      %p163 = por %p161, %p162
      %p164 = scmp.ne.s32.totalorder %s152, %s153
      %p165 = scmp.eq.s32.totalorder %s37, 3
      %p166 = por %p164, %p165
      %p168 = scmp.ne.s32.totalorder %s153, %s167
      %p169 = scmp.eq.s32.totalorder %s37, 0
      %p170 = por %p168, %p169
      %s172 = sadd.s32 %s171, 1
      %p175 = scmp.eq.s32.totalorder %s31, 3
      %p176 = scmp.ne.s32.totalorder %s171, %s173
      %p177 = scmp.eq.s32.totalorder %s31, 0
      %p178 = por %p176, %p177
      %p179 = scmp.ne.s32.totalorder %s171, %s173
      %p180 = scmp.eq.s32.totalorder %s36, 3
      %p181 = por %p179, %p180
      %p182 = scmp.ne.s32.totalorder %s173, %s174
      %p183 = scmp.eq.s32.totalorder %s36, 0
      %p184 = por %p182, %p183
      %p185 = scmp.ne.s32.totalorder %s173, %s174
      %p186 = scmp.eq.s32.totalorder %s37, 3
      %p187 = por %p185, %p186
      %p189 = scmp.ne.s32.totalorder %s174, %s188
      %p190 = scmp.eq.s32.totalorder %s37, 0
      %p191 = por %p189, %p190
      %s193 = sadd.s32 %s192, 1
      %p196 = scmp.eq.s32.totalorder %s31, 3
      %p197 = scmp.ne.s32.totalorder %s192, %s194
      %p198 = scmp.eq.s32.totalorder %s31, 0
      %p199 = por %p197, %p198
      %p200 = scmp.ne.s32.totalorder %s192, %s194
      %p201 = scmp.eq.s32.totalorder %s36, 3
      %p202 = por %p200, %p201
      %p203 = scmp.ne.s32.totalorder %s194, %s195
      %p204 = scmp.eq.s32.totalorder %s36, 0
      %p205 = por %p203, %p204
      %p206 = scmp.ne.s32.totalorder %s194, %s195
      %p207 = scmp.eq.s32.totalorder %s37, 3
      %p208 = por %p206, %p207
      %p210 = scmp.ne.s32.totalorder %s195, %s209
      %p211 = scmp.eq.s32.totalorder %s37, 0
      %p212 = por %p210, %p211
      %s213 = ssub.s32 %s39, %s46
      %p214 = scmp.eq.s32.totalorder %s213, 0
      %s216 = sadd.s32 %s215, 1
      %s217 = scalar_select %p214, %s215, %s216
      %p220 = pneg %p214
      %p221 = scmp.eq.s32.totalorder %s31, 3
      %p222 = por %p220, %p221
      %p223 = scmp.ne.s32.totalorder %s215, %s218
      %p224 = scmp.eq.s32.totalorder %s31, 0
      %p225 = por %p223, %p224
      %p226 = scmp.ne.s32.totalorder %s215, %s218
      %p227 = scmp.eq.s32.totalorder %s36, 3
      %p228 = por %p226, %p227
      %p229 = scmp.ne.s32.totalorder %s218, %s219
      %p230 = scmp.eq.s32.totalorder %s36, 0
      %p231 = por %p229, %p230
      %p232 = scmp.ne.s32.totalorder %s218, %s219
      %p233 = scmp.eq.s32.totalorder %s37, 3
      %p234 = por %p232, %p233
      %p236 = scmp.ne.s32.totalorder %s219, %s235
      %p237 = scmp.eq.s32.totalorder %s37, 0
      %p238 = por %p236, %p237
      %s239 = ssub.s32 %s39, %s46
      %p240 = scmp.eq.s32.totalorder %s239, 0
      %s242 = sadd.s32 %s241, 1
      %s243 = scalar_select %p240, %s241, %s242
      %p246 = pneg %p240
      %p247 = scmp.eq.s32.totalorder %s31, 3
      %p248 = por %p246, %p247
      %p249 = scmp.ne.s32.totalorder %s241, %s244
      %p250 = scmp.eq.s32.totalorder %s31, 0
      %p251 = por %p249, %p250
      %p252 = scmp.ne.s32.totalorder %s241, %s244
      %p253 = scmp.eq.s32.totalorder %s36, 3
      %p254 = por %p252, %p253
      %p255 = scmp.ne.s32.totalorder %s244, %s245
      %p256 = scmp.eq.s32.totalorder %s36, 0
      %p257 = por %p255, %p256
      %p258 = scmp.ne.s32.totalorder %s244, %s245
      %p259 = scmp.eq.s32.totalorder %s37, 3
      %p260 = por %p258, %p259
      %p262 = scmp.ne.s32.totalorder %s245, %s261
      %p263 = scmp.eq.s32.totalorder %s37, 0
      %p264 = por %p262, %p263
      %s265 = ssub.s32 %s39, %s46
      %p266 = scmp.eq.s32.totalorder %s265, 0
      %s268 = sadd.s32 %s267, 1
      %s269 = scalar_select %p266, %s267, %s268
      %p272 = pneg %p266
      %p273 = scmp.eq.s32.totalorder %s31, 3
      %p274 = por %p272, %p273
      %p275 = scmp.ne.s32.totalorder %s267, %s270
      %p276 = scmp.eq.s32.totalorder %s31, 0
      %p277 = por %p275, %p276
      %p278 = scmp.ne.s32.totalorder %s267, %s270
      %p279 = scmp.eq.s32.totalorder %s36, 3
      %p280 = por %p278, %p279
      %p281 = scmp.ne.s32.totalorder %s270, %s271
      %p282 = scmp.eq.s32.totalorder %s36, 0
      %p283 = por %p281, %p282
      %p284 = scmp.ne.s32.totalorder %s270, %s271
      %p285 = scmp.eq.s32.totalorder %s37, 3
      %p286 = por %p284, %p285
      %p288 = scmp.ne.s32.totalorder %s271, %s287
      %p289 = scmp.eq.s32.totalorder %s37, 0
      %p290 = por %p288, %p289
      %s291 = ssub.s32 %s39, %s46
      %p292 = scmp.eq.s32.totalorder %s291, 0
      %s294 = sadd.s32 %s293, 1
      %s295 = scalar_select %p292, %s293, %s294
      %p298 = pneg %p292
      %p299 = scmp.eq.s32.totalorder %s31, 3
      %p300 = por %p298, %p299
      %p301 = scmp.ne.s32.totalorder %s293, %s296
      %p302 = scmp.eq.s32.totalorder %s31, 0
      %p303 = por %p301, %p302
      %p304 = scmp.ne.s32.totalorder %s293, %s296
      %p305 = scmp.eq.s32.totalorder %s36, 3
      %p306 = por %p304, %p305
      %p307 = scmp.ne.s32.totalorder %s296, %s297
      %p308 = scmp.eq.s32.totalorder %s36, 0
      %p309 = por %p307, %p308
      %p310 = scmp.ne.s32.totalorder %s296, %s297
      %p311 = scmp.eq.s32.totalorder %s37, 3
      %p312 = por %p310, %p311
      %p314 = scmp.ne.s32.totalorder %s297, %s313
      %p315 = scmp.eq.s32.totalorder %s37, 0
      %p316 = por %p314, %p315
      %s317 = ssub.s32 %s39, %s46
      %p318 = scmp.eq.s32.totalorder %s317, 0
      %s320 = sadd.s32 %s319, 1
      %s321 = scalar_select %p318, %s319, %s320
      %p324 = pneg %p318
      %p325 = scmp.eq.s32.totalorder %s31, 3
      %p326 = por %p324, %p325
      %p327 = scmp.ne.s32.totalorder %s319, %s322
      %p328 = scmp.eq.s32.totalorder %s31, 0
      %p329 = por %p327, %p328
      %p330 = scmp.ne.s32.totalorder %s319, %s322
      %p331 = scmp.eq.s32.totalorder %s36, 3
      %p332 = por %p330, %p331
      %p333 = scmp.ne.s32.totalorder %s322, %s323
      %p334 = scmp.eq.s32.totalorder %s36, 0
      %p335 = por %p333, %p334
      %p336 = scmp.ne.s32.totalorder %s322, %s323
      %p337 = scmp.eq.s32.totalorder %s37, 3
      %p338 = por %p336, %p337
      %p340 = scmp.ne.s32.totalorder %s323, %s339
      %p341 = scmp.eq.s32.totalorder %s37, 0
      %p342 = por %p340, %p341
      %s343 = ssub.s32 %s39, %s46
      %p344 = scmp.eq.s32.totalorder %s343, 0
      %s346 = sadd.s32 %s345, 1
      %s347 = scalar_select %p344, %s345, %s346
      %p350 = pneg %p344
      %p351 = scmp.eq.s32.totalorder %s31, 3
      %p352 = por %p350, %p351
      %p353 = scmp.ne.s32.totalorder %s345, %s348
      %p354 = scmp.eq.s32.totalorder %s31, 0
      %p355 = por %p353, %p354
      %p356 = scmp.ne.s32.totalorder %s345, %s348
      %p357 = scmp.eq.s32.totalorder %s36, 3
      %p358 = por %p356, %p357
      %p359 = scmp.ne.s32.totalorder %s348, %s349
      %p360 = scmp.eq.s32.totalorder %s36, 0
      %p361 = por %p359, %p360
      %p362 = scmp.ne.s32.totalorder %s348, %s349
      %p363 = scmp.eq.s32.totalorder %s37, 3
      %p364 = por %p362, %p363
      %p366 = scmp.ne.s32.totalorder %s349, %s365
      %p367 = scmp.eq.s32.totalorder %s37, 0
      %p368 = por %p366, %p367
      %s369 = ssub.s32 %s39, %s46
      %p370 = scmp.eq.s32.totalorder %s369, 0
      %s372 = sadd.s32 %s371, 1
      %s373 = scalar_select %p370, %s371, %s372
      %p376 = pneg %p370
      %p377 = scmp.eq.s32.totalorder %s31, 3
      %p378 = por %p376, %p377
      %p379 = scmp.ne.s32.totalorder %s371, %s374
      %p380 = scmp.eq.s32.totalorder %s31, 0
      %p381 = por %p379, %p380
      %p382 = scmp.ne.s32.totalorder %s371, %s374
      %p383 = scmp.eq.s32.totalorder %s36, 3
      %p384 = por %p382, %p383
      %p385 = scmp.ne.s32.totalorder %s374, %s375
      %p386 = scmp.eq.s32.totalorder %s36, 0
      %p387 = por %p385, %p386
      %p388 = scmp.ne.s32.totalorder %s374, %s375
      %p389 = scmp.eq.s32.totalorder %s37, 3
      %p390 = por %p388, %p389
      %p392 = scmp.ne.s32.totalorder %s375, %s391
      %p393 = scmp.eq.s32.totalorder %s37, 0
      %p394 = por %p392, %p393
      %s395 = ssub.s32 %s39, %s46
      %p396 = scmp.eq.s32.totalorder %s395, 0
      %s398 = sadd.s32 %s397, 1
      %s399 = scalar_select %p396, %s397, %s398
      %p402 = pneg %p396
      %p403 = scmp.eq.s32.totalorder %s31, 3
      %p404 = por %p402, %p403
      %p405 = scmp.ne.s32.totalorder %s397, %s400
      %p406 = scmp.eq.s32.totalorder %s31, 0
      %p407 = por %p405, %p406
      %p408 = scmp.ne.s32.totalorder %s397, %s400
      %p409 = scmp.eq.s32.totalorder %s36, 3
      %p410 = por %p408, %p409
      %p411 = scmp.ne.s32.totalorder %s400, %s401
      %p412 = scmp.eq.s32.totalorder %s36, 0
      %p413 = por %p411, %p412
      %p414 = scmp.ne.s32.totalorder %s400, %s401
      %p415 = scmp.eq.s32.totalorder %s37, 3
      %p416 = por %p414, %p415
      %p418 = scmp.ne.s32.totalorder %s401, %s417
      %p419 = scmp.eq.s32.totalorder %s37, 0
      %p420 = por %p418, %p419
      %s421 = ssub.s32 %s39, %s46
      %p422 = scmp.eq.s32.totalorder %s421, 0
      %s424 = sadd.s32 %s423, 1
      %s425 = scalar_select %p422, %s423, %s424
      %p428 = pneg %p422
      %p429 = scmp.eq.s32.totalorder %s31, 3
      %p430 = por %p428, %p429
      %p431 = scmp.ne.s32.totalorder %s423, %s426
      %p432 = scmp.eq.s32.totalorder %s31, 0
      %p433 = por %p431, %p432
      %p434 = scmp.ne.s32.totalorder %s423, %s426
      %p435 = scmp.eq.s32.totalorder %s36, 3
      %p436 = por %p434, %p435
      %p437 = scmp.ne.s32.totalorder %s426, %s427
      %p438 = scmp.eq.s32.totalorder %s36, 0
      %p439 = por %p437, %p438
      %p440 = scmp.ne.s32.totalorder %s426, %s427
      %p441 = scmp.eq.s32.totalorder %s37, 3
      %p442 = por %p440, %p441
      %p444 = scmp.ne.s32.totalorder %s427, %s443
      %p445 = scmp.eq.s32.totalorder %s37, 0
      %p446 = por %p444, %p445
      %s447 = ssub.s32 %s39, %s46
      %p448 = scmp.eq.s32.totalorder %s447, 0
      %s450 = sadd.s32 %s449, 1
      %s451 = scalar_select %p448, %s449, %s450
      %p454 = pneg %p448
      %p455 = scmp.eq.s32.totalorder %s31, 3
      %p456 = por %p454, %p455
      %p457 = scmp.ne.s32.totalorder %s449, %s452
      %p458 = scmp.eq.s32.totalorder %s31, 0
      %p459 = por %p457, %p458
      %p460 = scmp.ne.s32.totalorder %s449, %s452
      %p461 = scmp.eq.s32.totalorder %s36, 3
      %p462 = por %p460, %p461
      %p463 = scmp.ne.s32.totalorder %s452, %s453
      %p464 = scmp.eq.s32.totalorder %s36, 0
      %p465 = por %p463, %p464
      %p466 = scmp.ne.s32.totalorder %s452, %s453
      %p467 = scmp.eq.s32.totalorder %s37, 3
      %p468 = por %p466, %p467
      %p470 = scmp.ne.s32.totalorder %s453, %s469
      %p471 = scmp.eq.s32.totalorder %s37, 0
      %p472 = por %p470, %p471
      %s473 = ssub.s32 %s39, %s46
      %p474 = scmp.eq.s32.totalorder %s473, 0
      %s476 = sadd.s32 %s475, 1
      %s477 = scalar_select %p474, %s475, %s476
      %p480 = pneg %p474
      %p481 = scmp.eq.s32.totalorder %s31, 3
      %p482 = por %p480, %p481
      %p483 = scmp.ne.s32.totalorder %s475, %s478
      %p484 = scmp.eq.s32.totalorder %s31, 0
      %p485 = por %p483, %p484
      %p486 = scmp.ne.s32.totalorder %s475, %s478
      %p487 = scmp.eq.s32.totalorder %s36, 3
      %p488 = por %p486, %p487
      %p489 = scmp.ne.s32.totalorder %s478, %s479
      %p490 = scmp.eq.s32.totalorder %s36, 0
      %p491 = por %p489, %p490
      %p492 = scmp.ne.s32.totalorder %s478, %s479
      %p493 = scmp.eq.s32.totalorder %s37, 3
      %p494 = por %p492, %p493
      %p496 = scmp.ne.s32.totalorder %s479, %s495
      %p497 = scmp.eq.s32.totalorder %s37, 0
      %p498 = por %p496, %p497
      %s499 = ssub.s32 %s39, %s46
      %p500 = scmp.eq.s32.totalorder %s499, 0
      %s502 = sadd.s32 %s501, 1
      %s503 = scalar_select %p500, %s501, %s502
      %p506 = pneg %p500
      %p507 = scmp.eq.s32.totalorder %s31, 3
      %p508 = por %p506, %p507
      %p509 = scmp.ne.s32.totalorder %s501, %s504
      %p510 = scmp.eq.s32.totalorder %s31, 0
      %p511 = por %p509, %p510
      %p512 = scmp.ne.s32.totalorder %s501, %s504
      %p513 = scmp.eq.s32.totalorder %s36, 3
      %p514 = por %p512, %p513
      %p515 = scmp.ne.s32.totalorder %s504, %s505
      %p516 = scmp.eq.s32.totalorder %s36, 0
      %p517 = por %p515, %p516
      %p518 = scmp.ne.s32.totalorder %s504, %s505
      %p519 = scmp.eq.s32.totalorder %s37, 3
      %p520 = por %p518, %p519
      %p522 = scmp.ne.s32.totalorder %s505, %s521
      %p523 = scmp.eq.s32.totalorder %s37, 0
      %p524 = por %p522, %p523
      %s525 = ssub.s32 %s38, %s50
      %p526 = scmp.eq.s32.totalorder %s525, 0
      %s528 = sadd.s32 %s527, 1
      %s529 = scalar_select %p526, %s527, %s528
      %p532 = pneg %p526
      %p533 = scmp.eq.s32.totalorder %s31, 3
      %p534 = por %p532, %p533
      %p535 = scmp.ne.s32.totalorder %s527, %s530
      %p536 = scmp.eq.s32.totalorder %s31, 0
      %p537 = por %p535, %p536
      %p538 = scmp.ne.s32.totalorder %s527, %s530
      %p539 = scmp.eq.s32.totalorder %s36, 3
      %p540 = por %p538, %p539
      %p541 = scmp.ne.s32.totalorder %s530, %s531
      %p542 = scmp.eq.s32.totalorder %s36, 0
      %p543 = por %p541, %p542
      %p544 = scmp.ne.s32.totalorder %s530, %s531
      %p545 = scmp.eq.s32.totalorder %s37, 3
      %p546 = por %p544, %p545
      %p548 = scmp.ne.s32.totalorder %s531, %s547
      %p549 = scmp.eq.s32.totalorder %s37, 0
      %p550 = por %p548, %p549
      %p551 = scmp.le.s32.totalorder 1, %s31
      %p552 = scmp.lt.s32.totalorder %s31, 5
      %p553 = pnand %p551, %p552
      %p554 = pneg %p553
      // Predicated region
      $region9: #{tpu_custom_call.1} parent=5 // pred_check
        _
      $region10: #{tpu_custom_call.1} parent=5 // pred_check_branch
        %556 = sbr.rel (%p553) target = $region12
      $region11: #{tpu_custom_call.1} parent=5 // pred_region
        %s557 = ssub.s32 %s31, 1
        // Predicated region
        $region13: #{tpu_custom_call.1} parent=11 // pred_check
          %p558 = pneg %p142
        $region14: #{tpu_custom_call.1} parent=11 // pred_check_branch
          %560 = sbr.rel (%p558) target = $region16
        $region15: #{tpu_custom_call.1} parent=11 // pred_region
          %s562 = ssub.s32 384, 384
          %563 = vsyncadd [#allocation4], %s562
          %s564 = sshll.u32 [#allocation3], 4
          %s565 = int_to_ptr.vmem [resolvable:$true] %s564
          %570 = dma.hbm_to_vmem [thread:$0]  %s3, 384, %s565, [#allocation4], 128, 128, 8
        $region16: #{tpu_custom_call.1} parent=11 // pred_fallthru
          _
        // Predicated region
        $region17: #{tpu_custom_call.1} parent=11 // pred_check
          %p571 = pneg %p163
        $region18: #{tpu_custom_call.1} parent=11 // pred_check_branch
          %573 = sbr.rel (%p571) target = $region20
        $region19: #{tpu_custom_call.1} parent=11 // pred_region
          %s575 = ssub.s32 384, 384
          %576 = vsyncadd [#allocation7], %s575
          %s577 = sshll.u32 [#allocation6], 4
          %s578 = int_to_ptr.vmem [resolvable:$true] %s577
          %583 = dma.hbm_to_vmem [thread:$0]  %s4, 384, %s578, [#allocation7], 128, 128, 8
        $region20: #{tpu_custom_call.1} parent=11 // pred_fallthru
          _
        // Predicated region
        $region21: #{tpu_custom_call.1} parent=11 // pred_check
          %p584 = pneg %p184
        $region22: #{tpu_custom_call.1} parent=11 // pred_check_branch
          %586 = sbr.rel (%p584) target = $region24
        $region23: #{tpu_custom_call.1} parent=11 // pred_region
          %s588 = ssub.s32 384, 384
          %589 = vsyncadd [#allocation7], %s588
          %s590 = sshll.u32 [#allocation8], 4
          %s591 = int_to_ptr.vmem [resolvable:$true] %s590
          %596 = dma.hbm_to_vmem [thread:$0]  %s5, 384, %s591, [#allocation7], 128, 128, 8
        $region24: #{tpu_custom_call.1} parent=11 // pred_fallthru
          _
        // Predicated region
        $region25: #{tpu_custom_call.1} parent=11 // pred_check
          %p597 = pneg %p205
        $region26: #{tpu_custom_call.1} parent=11 // pred_check_branch
          %599 = sbr.rel (%p597) target = $region28
        $region27: #{tpu_custom_call.1} parent=11 // pred_region
          %s601 = ssub.s32 128, 128
          %602 = vsyncadd [#allocation10], %s601
          %s604 = sshll.u32 [#allocation9], 4
          %s605 = int_to_ptr.vmem [resolvable:$true] %s604
          %607 = dma.hbm_to_vmem [thread:$0]  %s6, 128, %s605, [#allocation10]
        $region28: #{tpu_custom_call.1} parent=11 // pred_fallthru
          _
      $region12: #{tpu_custom_call.1} parent=5 // pred_fallthru
        _
      %p608 = scmp.lt.s32.totalorder %s31, 4
      // Predicated region
      $region29: #{tpu_custom_call.1} parent=5 // pred_check
        %p609 = pneg %p608
      $region30: #{tpu_custom_call.1} parent=5 // pred_check_branch
        %611 = sbr.rel (%p609) target = $region32
      $region31: #{tpu_custom_call.1} parent=5 // pred_region
        // Predicated region
        $region33: #{tpu_custom_call.1} parent=31 // pred_check
          %p612 = pneg %p63
        $region34: #{tpu_custom_call.1} parent=31 // pred_check_branch
          %614 = sbr.rel (%p612) target = $region36
        $region35: #{tpu_custom_call.1} parent=31 // pred_region
          %p615 = scmp.lt.s32.totalorder %s38, 1
          %s616 = scalar_select %p615, %s38, 1
          %s617 = smul.addr %s616, 8
          %s618 = scalar_lea.vmem %s0, %s617
        $region36: #{tpu_custom_call.1} parent=31 // pred_fallthru
          _
        // Predicated region
        $region37: #{tpu_custom_call.1} parent=31 // pred_check
          %p619 = pneg %p89
        $region38: #{tpu_custom_call.1} parent=31 // pred_check_branch
          %621 = sbr.rel (%p619) target = $region40
        $region39: #{tpu_custom_call.1} parent=31 // pred_region
          %p622 = scmp.lt.s32.totalorder %s38, 1
          %s623 = scalar_select %p622, %s38, 1
          %s624 = smul.addr %s623, 8
          %s625 = scalar_lea.vmem %s1, %s624
        $region40: #{tpu_custom_call.1} parent=31 // pred_fallthru
          _
        // Predicated region
        $region41: #{tpu_custom_call.1} parent=31 // pred_check
          %p626 = pneg %p115
        $region42: #{tpu_custom_call.1} parent=31 // pred_check_branch
          %628 = sbr.rel (%p626) target = $region44
        $region43: #{tpu_custom_call.1} parent=31 // pred_region
          %p629 = scmp.lt.s32.totalorder %s38, 1
          %s630 = scalar_select %p629, %s38, 1
          %s631 = smul.addr %s630, 8
          %s632 = scalar_lea.vmem %s2, %s631
        $region44: #{tpu_custom_call.1} parent=31 // pred_fallthru
          _
        // Predicated region
        $region45: #{tpu_custom_call.1} parent=31 // pred_check
          %p633 = pneg %p225
        $region46: #{tpu_custom_call.1} parent=31 // pred_check_branch
          %635 = sbr.rel (%p633) target = $region48
        $region47: #{tpu_custom_call.1} parent=31 // pred_region
          %s636 = sand.u32 %s31, 1
          %s637 = scalar_lea.sflag [#allocation4], %s636
          %s638 = sand.u32 %s215, 1
          %s639 = smul.addr %s638, 16
          %s640 = scalar_lea.vmem [#allocation11], %s639
          %s642 = ssub.s32 256, 256
          %643 = vsyncadd %s637, %s642
          %s644 = smul.addr %s39, 4
          %s645 = smul.addr %s644, 64
          %s646 = scalar_lea.hbm %s7, %s645
          %s647 = sshll.u32 %s640, 4
          %s648 = int_to_ptr.vmem [resolvable:$true] %s647
          %653 = dma.hbm_to_vmem [thread:$0]  %s646, 256, %s648, %s637, 64, 64, 4
        $region48: #{tpu_custom_call.1} parent=31 // pred_fallthru
          _
        // Predicated region
        $region49: #{tpu_custom_call.1} parent=31 // pred_check
          %p654 = pneg %p251
        $region50: #{tpu_custom_call.1} parent=31 // pred_check_branch
          %656 = sbr.rel (%p654) target = $region52
        $region51: #{tpu_custom_call.1} parent=31 // pred_region
          %p657 = scmp.lt.s32.totalorder %s39, 1
          %s658 = scalar_select %p657, %s39, 1
          %s659 = scalar_lea.vmem %s8, %s658
        $region52: #{tpu_custom_call.1} parent=31 // pred_fallthru
          _
        // Predicated region
        $region53: #{tpu_custom_call.1} parent=31 // pred_check
          %p660 = pneg %p277
        $region54: #{tpu_custom_call.1} parent=31 // pred_check_branch
          %662 = sbr.rel (%p660) target = $region56
        $region55: #{tpu_custom_call.1} parent=31 // pred_region
          %s663 = sand.u32 %s31, 1
          %s664 = scalar_lea.sflag [#allocation4], %s663
          %s665 = sand.u32 %s267, 1
          %s666 = smul.addr %s665, 16
          %s667 = scalar_lea.vmem [#allocation12], %s666
          %s669 = ssub.s32 256, 256
          %670 = vsyncadd %s664, %s669
          %s671 = smul.addr %s39, 4
          %s672 = smul.addr %s671, 64
          %s673 = scalar_lea.hbm %s9, %s672
          %s674 = sshll.u32 %s667, 4
          %s675 = int_to_ptr.vmem [resolvable:$true] %s674
          %680 = dma.hbm_to_vmem [thread:$0]  %s673, 256, %s675, %s664, 64, 64, 4
        $region56: #{tpu_custom_call.1} parent=31 // pred_fallthru
          _
        // Predicated region
        $region57: #{tpu_custom_call.1} parent=31 // pred_check
          %p681 = pneg %p303
        $region58: #{tpu_custom_call.1} parent=31 // pred_check_branch
          %683 = sbr.rel (%p681) target = $region60
        $region59: #{tpu_custom_call.1} parent=31 // pred_region
          %p684 = scmp.lt.s32.totalorder %s39, 1
          %s685 = scalar_select %p684, %s39, 1
          %s686 = scalar_lea.vmem %s10, %s685
        $region60: #{tpu_custom_call.1} parent=31 // pred_fallthru
          _
        // Predicated region
        $region61: #{tpu_custom_call.1} parent=31 // pred_check
          %p687 = pneg %p329
        $region62: #{tpu_custom_call.1} parent=31 // pred_check_branch
          %689 = sbr.rel (%p687) target = $region64
        $region63: #{tpu_custom_call.1} parent=31 // pred_region
          %p690 = scmp.lt.s32.totalorder %s39, 1
          %s691 = scalar_select %p690, %s39, 1
          %s692 = scalar_lea.vmem %s11, %s691
        $region64: #{tpu_custom_call.1} parent=31 // pred_fallthru
          _
        // Predicated region
        $region65: #{tpu_custom_call.1} parent=31 // pred_check
          %p693 = pneg %p355
        $region66: #{tpu_custom_call.1} parent=31 // pred_check_branch
          %695 = sbr.rel (%p693) target = $region68
        $region67: #{tpu_custom_call.1} parent=31 // pred_region
          %s696 = sand.u32 %s31, 1
          %s697 = scalar_lea.sflag [#allocation4], %s696
          %s698 = sand.u32 %s345, 1
          %s699 = scalar_lea.vmem [#allocation13], %s698
          %s701 = ssub.s32 16, 16
          %702 = vsyncadd %s697, %s701
          %s703 = smul.addr %s39, 16
          %s704 = scalar_lea.hbm %s12, %s703
          %s706 = sshll.u32 %s699, 4
          %s707 = int_to_ptr.vmem [resolvable:$true] %s706
          %709 = dma.hbm_to_vmem [thread:$0]  %s704, 16, %s707, %s697
        $region68: #{tpu_custom_call.1} parent=31 // pred_fallthru
          _
        // Predicated region
        $region69: #{tpu_custom_call.1} parent=31 // pred_check
          %p710 = pneg %p381
        $region70: #{tpu_custom_call.1} parent=31 // pred_check_branch
          %712 = sbr.rel (%p710) target = $region72
        $region71: #{tpu_custom_call.1} parent=31 // pred_region
          %p713 = scmp.lt.s32.totalorder %s39, 1
          %s714 = scalar_select %p713, %s39, 1
          %s715 = smul.addr %s714, 12
          %s716 = smul.addr %s715, 4
          %s717 = scalar_lea.vmem %s13, %s716
        $region72: #{tpu_custom_call.1} parent=31 // pred_fallthru
          _
        // Predicated region
        $region73: #{tpu_custom_call.1} parent=31 // pred_check
          %p718 = pneg %p407
        $region74: #{tpu_custom_call.1} parent=31 // pred_check_branch
          %720 = sbr.rel (%p718) target = $region76
        $region75: #{tpu_custom_call.1} parent=31 // pred_region
          %p721 = scmp.lt.s32.totalorder %s39, 1
          %s722 = scalar_select %p721, %s39, 1
          %s723 = scalar_lea.vmem %s14, %s722
        $region76: #{tpu_custom_call.1} parent=31 // pred_fallthru
          _
        // Predicated region
        $region77: #{tpu_custom_call.1} parent=31 // pred_check
          %p724 = pneg %p433
        $region78: #{tpu_custom_call.1} parent=31 // pred_check_branch
          %726 = sbr.rel (%p724) target = $region80
        $region79: #{tpu_custom_call.1} parent=31 // pred_region
          %s727 = sand.u32 %s31, 1
          %s728 = scalar_lea.sflag [#allocation4], %s727
          %s729 = sand.u32 %s423, 1
          %s730 = smul.addr %s729, 16
          %s731 = scalar_lea.vmem [#allocation14], %s730
          %s733 = ssub.s32 256, 256
          %734 = vsyncadd %s728, %s733
          %s735 = smul.addr %s39, 4
          %s736 = smul.addr %s735, 64
          %s737 = scalar_lea.hbm %s15, %s736
          %s738 = sshll.u32 %s731, 4
          %s739 = int_to_ptr.vmem [resolvable:$true] %s738
          %744 = dma.hbm_to_vmem [thread:$0]  %s737, 256, %s739, %s728, 64, 64, 4
        $region80: #{tpu_custom_call.1} parent=31 // pred_fallthru
          _
        // Predicated region
        $region81: #{tpu_custom_call.1} parent=31 // pred_check
          %p745 = pneg %p459
        $region82: #{tpu_custom_call.1} parent=31 // pred_check_branch
          %747 = sbr.rel (%p745) target = $region84
        $region83: #{tpu_custom_call.1} parent=31 // pred_region
          %p748 = scmp.lt.s32.totalorder %s39, 1
          %s749 = scalar_select %p748, %s39, 1
          %s750 = scalar_lea.vmem %s16, %s749
        $region84: #{tpu_custom_call.1} parent=31 // pred_fallthru
          _
        // Predicated region
        $region85: #{tpu_custom_call.1} parent=31 // pred_check
          %p751 = pneg %p485
        $region86: #{tpu_custom_call.1} parent=31 // pred_check_branch
          %753 = sbr.rel (%p751) target = $region88
        $region87: #{tpu_custom_call.1} parent=31 // pred_region
          %p754 = scmp.lt.s32.totalorder %s39, 1
          %s755 = scalar_select %p754, %s39, 1
          %s756 = scalar_lea.vmem %s17, %s755
        $region88: #{tpu_custom_call.1} parent=31 // pred_fallthru
          _
        // Predicated region
        $region89: #{tpu_custom_call.1} parent=31 // pred_check
          %p757 = pneg %p511
        $region90: #{tpu_custom_call.1} parent=31 // pred_check_branch
          %759 = sbr.rel (%p757) target = $region92
        $region91: #{tpu_custom_call.1} parent=31 // pred_region
          %p760 = scmp.lt.s32.totalorder %s39, 1
          %s761 = scalar_select %p760, %s39, 1
          %s762 = scalar_lea.vmem %s18, %s761
        $region92: #{tpu_custom_call.1} parent=31 // pred_fallthru
          _
      $region32: #{tpu_custom_call.1} parent=5 // pred_fallthru
        _
      %p763 = scmp.le.s32.totalorder 1, %s31
      %p764 = scmp.lt.s32.totalorder %s31, 5
      %p765 = pnand %p763, %p764
      %p766 = pneg %p765
      // Predicated region
      $region93: #{tpu_custom_call.1} parent=5 // pred_check
        _
      $region94: #{tpu_custom_call.1} parent=5 // pred_check_branch
        %768 = sbr.rel (%p765) target = $region96
      $region95: #{tpu_custom_call.1} parent=5 // pred_region
        %s769 = ssub.s32 %s31, 1
        // Predicated region
        $region97: #{tpu_custom_call.1} parent=95 // pred_check
          %p770 = pneg %p142
        $region98: #{tpu_custom_call.1} parent=95 // pred_check_branch
          %772 = sbr.rel (%p770) target = $region100
        $region99: #{tpu_custom_call.1} parent=95 // pred_region
          %773 = dma.done [#allocation4], 384
        $region100: #{tpu_custom_call.1} parent=95 // pred_fallthru
          _
        // Predicated region
        $region101: #{tpu_custom_call.1} parent=95 // pred_check
          %p774 = pneg %p163
        $region102: #{tpu_custom_call.1} parent=95 // pred_check_branch
          %776 = sbr.rel (%p774) target = $region104
        $region103: #{tpu_custom_call.1} parent=95 // pred_region
          %777 = dma.done [#allocation7], 384
        $region104: #{tpu_custom_call.1} parent=95 // pred_fallthru
          _
        // Predicated region
        $region105: #{tpu_custom_call.1} parent=95 // pred_check
          %p778 = pneg %p184
        $region106: #{tpu_custom_call.1} parent=95 // pred_check_branch
          %780 = sbr.rel (%p778) target = $region108
        $region107: #{tpu_custom_call.1} parent=95 // pred_region
          %781 = dma.done [#allocation7], 384
        $region108: #{tpu_custom_call.1} parent=95 // pred_fallthru
          _
        // Predicated region
        $region109: #{tpu_custom_call.1} parent=95 // pred_check
          %p782 = pneg %p205
        $region110: #{tpu_custom_call.1} parent=95 // pred_check_branch
          %784 = sbr.rel (%p782) target = $region112
        $region111: #{tpu_custom_call.1} parent=95 // pred_region
          %785 = dma.done [#allocation10], 128
        $region112: #{tpu_custom_call.1} parent=95 // pred_fallthru
          _
        %s786 = sand.u32 %s36, 1
        %s787 = scalar_lea.sflag [#allocation4], %s786
        %s788 = sand.u32 %s218, 1
        %s789 = smul.addr %s788, 16
        %s790 = scalar_lea.vmem [#allocation11], %s789
        // Predicated region
        $region113: #{tpu_custom_call.1} parent=95 // pred_check
          %p791 = pneg %p231
        $region114: #{tpu_custom_call.1} parent=95 // pred_check_branch
          %793 = sbr.rel (%p791) target = $region116
        $region115: #{tpu_custom_call.1} parent=95 // pred_region
          %794 = dma.done %s787, 256
        $region116: #{tpu_custom_call.1} parent=95 // pred_fallthru
          _
        %s795 = sand.u32 %s36, 1
        %s796 = scalar_lea.sflag [#allocation4], %s795
        %s797 = sand.u32 %s270, 1
        %s798 = smul.addr %s797, 16
        %s799 = scalar_lea.vmem [#allocation12], %s798
        // Predicated region
        $region117: #{tpu_custom_call.1} parent=95 // pred_check
          %p800 = pneg %p283
        $region118: #{tpu_custom_call.1} parent=95 // pred_check_branch
          %802 = sbr.rel (%p800) target = $region120
        $region119: #{tpu_custom_call.1} parent=95 // pred_region
          %803 = dma.done %s796, 256
        $region120: #{tpu_custom_call.1} parent=95 // pred_fallthru
          _
        %s804 = sand.u32 %s36, 1
        %s805 = scalar_lea.sflag [#allocation4], %s804
        %s806 = sand.u32 %s348, 1
        %s807 = scalar_lea.vmem [#allocation13], %s806
        // Predicated region
        $region121: #{tpu_custom_call.1} parent=95 // pred_check
          %p808 = pneg %p361
        $region122: #{tpu_custom_call.1} parent=95 // pred_check_branch
          %810 = sbr.rel (%p808) target = $region124
        $region123: #{tpu_custom_call.1} parent=95 // pred_region
          %811 = dma.done %s805, 16
        $region124: #{tpu_custom_call.1} parent=95 // pred_fallthru
          _
        %s812 = sand.u32 %s36, 1
        %s813 = scalar_lea.sflag [#allocation4], %s812
        %s814 = sand.u32 %s426, 1
        %s815 = smul.addr %s814, 16
        %s816 = scalar_lea.vmem [#allocation14], %s815
        // Predicated region
        $region125: #{tpu_custom_call.1} parent=95 // pred_check
          %p817 = pneg %p439
        $region126: #{tpu_custom_call.1} parent=95 // pred_check_branch
          %819 = sbr.rel (%p817) target = $region128
        $region127: #{tpu_custom_call.1} parent=95 // pred_region
          %820 = dma.done %s813, 256
        $region128: #{tpu_custom_call.1} parent=95 // pred_fallthru
          _
        %p821 = scmp.lt.s32.totalorder %s40, 1
        %s822 = scalar_select %p821, %s40, 1
        %s823 = smul.addr %s822, 8
        %s824 = scalar_lea.vmem %s0, %s823
        %p825 = pneg %p69
        %p826 = pneg %p66
        %p827 = scmp.lt.s32.totalorder %s40, 1
        %s828 = scalar_select %p827, %s40, 1
        %s829 = smul.addr %s828, 8
        %s830 = scalar_lea.vmem %s1, %s829
        %p831 = pneg %p95
        %p832 = pneg %p92
        %p833 = scmp.lt.s32.totalorder %s40, 1
        %s834 = scalar_select %p833, %s40, 1
        %s835 = smul.addr %s834, 8
        %s836 = scalar_lea.vmem %s2, %s835
        %p837 = pneg %p121
        %p838 = pneg %p118
        %p839 = pneg %p142
        %p840 = pneg %p139
        %p841 = pneg %p163
        %p842 = pneg %p160
        %p843 = pneg %p184
        %p844 = pneg %p181
        %p845 = pneg %p205
        %p846 = pneg %p202
        %s847 = sand.u32 %s36, 1
        %s848 = scalar_lea.sflag [#allocation4], %s847
        %s849 = sand.u32 %s218, 1
        %s850 = smul.addr %s849, 16
        %s851 = scalar_lea.vmem [#allocation11], %s850
        %p852 = pneg %p231
        %p853 = pneg %p228
        %p854 = scmp.lt.s32.totalorder %s41, 1
        %s855 = scalar_select %p854, %s41, 1
        %s856 = scalar_lea.vmem %s8, %s855
        %p857 = pneg %p257
        %p858 = pneg %p254
        %s859 = sand.u32 %s36, 1
        %s860 = scalar_lea.sflag [#allocation4], %s859
        %s861 = sand.u32 %s270, 1
        %s862 = smul.addr %s861, 16
        %s863 = scalar_lea.vmem [#allocation12], %s862
        %p864 = pneg %p283
        %p865 = pneg %p280
        %p866 = scmp.lt.s32.totalorder %s41, 1
        %s867 = scalar_select %p866, %s41, 1
        %s868 = scalar_lea.vmem %s10, %s867
        %p869 = pneg %p309
        %p870 = pneg %p306
        %p871 = scmp.lt.s32.totalorder %s41, 1
        %s872 = scalar_select %p871, %s41, 1
        %s873 = scalar_lea.vmem %s11, %s872
        %p874 = pneg %p335
        %p875 = pneg %p332
        %s876 = sand.u32 %s36, 1
        %s877 = scalar_lea.sflag [#allocation4], %s876
        %s878 = sand.u32 %s348, 1
        %s879 = scalar_lea.vmem [#allocation13], %s878
        %p880 = pneg %p361
        %p881 = pneg %p358
        %p882 = scmp.lt.s32.totalorder %s41, 1
        %s883 = scalar_select %p882, %s41, 1
        %s884 = smul.addr %s883, 12
        %s885 = smul.addr %s884, 4
        %s886 = scalar_lea.vmem %s13, %s885
        %p887 = pneg %p387
        %p888 = pneg %p384
        %p889 = scmp.lt.s32.totalorder %s41, 1
        %s890 = scalar_select %p889, %s41, 1
        %s891 = scalar_lea.vmem %s14, %s890
        %p892 = pneg %p413
        %p893 = pneg %p410
        %s894 = sand.u32 %s36, 1
        %s895 = scalar_lea.sflag [#allocation4], %s894
        %s896 = sand.u32 %s426, 1
        %s897 = smul.addr %s896, 16
        %s898 = scalar_lea.vmem [#allocation14], %s897
        %p899 = pneg %p439
        %p900 = pneg %p436
        %p901 = scmp.lt.s32.totalorder %s41, 1
        %s902 = scalar_select %p901, %s41, 1
        %s903 = scalar_lea.vmem %s16, %s902
        %p904 = pneg %p465
        %p905 = pneg %p462
        %p906 = scmp.lt.s32.totalorder %s41, 1
        %s907 = scalar_select %p906, %s41, 1
        %s908 = scalar_lea.vmem %s17, %s907
        %p909 = pneg %p491
        %p910 = pneg %p488
        %p911 = scmp.lt.s32.totalorder %s41, 1
        %s912 = scalar_select %p911, %s41, 1
        %s913 = scalar_lea.vmem %s18, %s912
        %p914 = pneg %p517
        %p915 = pneg %p514
        %p916 = pneg %p543
        %p917 = pneg %p540
        %s918 = sand.u32 %s530, 1
        %s919 = scalar_lea.sflag [#allocation5], %s918
        %s920 = sand.u32 %s530, 1
        %s921 = smul.addr %s920, 8
        %s922 = scalar_lea.vmem [#allocation15], %s921
        %p923 = scmp.lt.s32.totalorder %s40, 1
        %s924 = scalar_select %p923, %s40, 1
        %s925 = smul.addr %s924, 8
        %s926 = scalar_lea.vmem %s0, %s925
        %p927 = scmp.lt.s32.totalorder %s40, 1
        %s928 = scalar_select %p927, %s40, 1
        %s929 = smul.addr %s928, 8
        %s930 = scalar_lea.vmem %s1, %s929
        %p931 = scmp.lt.s32.totalorder %s40, 1
        %s932 = scalar_select %p931, %s40, 1
        %s933 = smul.addr %s932, 8
        %s934 = scalar_lea.vmem %s2, %s933
        %p935 = scmp.lt.s32.totalorder %s41, 1
        %s936 = scalar_select %p935, %s41, 1
        %s937 = scalar_lea.vmem %s8, %s936
        %p938 = scmp.lt.s32.totalorder %s41, 1
        %s939 = scalar_select %p938, %s41, 1
        %s940 = scalar_lea.vmem %s10, %s939
        %p941 = scmp.lt.s32.totalorder %s41, 1
        %s942 = scalar_select %p941, %s41, 1
        %s943 = scalar_lea.vmem %s11, %s942
        %p944 = scmp.lt.s32.totalorder %s41, 1
        %s945 = scalar_select %p944, %s41, 1
        %s946 = smul.addr %s945, 12
        %s947 = smul.addr %s946, 4
        %s948 = scalar_lea.vmem %s13, %s947
        %p949 = scmp.lt.s32.totalorder %s41, 1
        %s950 = scalar_select %p949, %s41, 1
        %s951 = scalar_lea.vmem %s14, %s950
        %p952 = scmp.lt.s32.totalorder %s41, 1
        %s953 = scalar_select %p952, %s41, 1
        %s954 = scalar_lea.vmem %s16, %s953
        %p955 = scmp.lt.s32.totalorder %s41, 1
        %s956 = scalar_select %p955, %s41, 1
        %s957 = scalar_lea.vmem %s17, %s956
        %p958 = scmp.lt.s32.totalorder %s41, 1
        %s959 = scalar_select %p958, %s41, 1
        %s960 = scalar_lea.vmem %s18, %s959
        %p962 = scmp.eq.s32.totalorder %s41, 0
        // Predicated region
        $region129: #{tpu_custom_call.1} parent=95 // pred_check
          %p963 = pneg %p962
        $region130: #{tpu_custom_call.1} parent=95 // pred_check_branch
          %965 = sbr.rel (%p963) target = $region132
        $region131: #{tpu_custom_call.1} parent=95 // pred_region
          %v966 = vld [vmem:[%s926] sm:$0xff]
          %v967 = vlaneseq
          %v968 = vand.u32 %v967, 127
          %969 = vset.pattern.permute.xlu0 0
          %970 = vperm.xlu0 %969, %v966
          %v971 = vpop.permute.xlu0 %970
          %vm972 = vcmp.eq.s32.totalorder %v968, %v971
          %v973 = vsel %vm972, 1, 0
          %v974 = vcvt.s32.f32 %v973
          %v975 = vld [vmem:[#allocation3] sm:$0xff]
          %v976 = vld [vmem:[#allocation3 + $0x8] sm:$0xff]
          %v977 = vld [vmem:[#allocation3 + $0x10] sm:$0x1]
          %v978 = vld [vmem:[%s930] sm:$0xff]
          %979 = vset.pattern.permute.xlu0 0
          %980 = vperm.xlu0 %979, %v978
          %v981 = vpop.permute.xlu0 %980
          %vm982 = vcmp.eq.s32.totalorder %v968, %v981
          %v983 = vsel %vm982, 1, 0
          %v984 = vcvt.s32.f32 %v983
          %v985 = vld [vmem:[#allocation6] sm:$0xff]
          %v986 = vld [vmem:[#allocation6 + $0x8] sm:$0xff]
          %v987 = vld [vmem:[#allocation6 + $0x10] sm:$0x1]
          %vm988 = vcmask 138240
          %v990 = vsel %vm988, %v984, 0
          %vm992 = vcmask 1040384
          %v994 = vsel %vm992, %v987, 0
          %996 = vmatprep.subr.mxu0 0.0
          %997 = vmatpush1.msra.mxu0 %v985
          %998 = vmatprep.subr.mxu0 0.0
          %999 = vmatpush1.msra.mxu0 %v986
          %1000 = vmatprep.subr.mxu0 0.0
          %1001 = vmatpush1.msra.mxu0 %v994
          %1002 = vmatprep.subr.mxu0 0.0
          %1003 = vmatpush1.msra.mxu0 0.0
          %1004 = vmatprep.subr.mxu0 0.0
          %1005 = vmatpush1.msra.mxu0 0.0
          %1006 = vmatprep.subr.mxu0 0.0
          %1007 = vmatpush1.msra.mxu0 0.0
          %1008 = vmatprep.subr.mxu0 0.0
          %1009 = vmatpush1.msra.mxu0 0.0
          %1010 = vmatprep.subr.mxu0 0.0
          %1011 = vmatpush1.msra.mxu0 0.0
          %1012 = vmatprep.subr.mxu0 0.0
          %1013 = vmatpush1.msra.mxu0 0.0
          %1014 = vmatprep.subr.mxu0 0.0
          %1015 = vmatpush1.msra.mxu0 0.0
          %1016 = vmatprep.subr.mxu0 0.0
          %1017 = vmatpush1.msra.mxu0 0.0
          %1018 = vmatprep.subr.mxu0 0.0
          %1019 = vmatpush1.msra.mxu0 0.0
          %1020 = vmatprep.subr.mxu0 0.0
          %1021 = vmatpush1.msra.mxu0 0.0
          %1022 = vmatprep.subr.mxu0 0.0
          %1023 = vmatpush1.msra.mxu0 0.0
          %1024 = vmatprep.subr.mxu0 0.0
          %1025 = vmatpush1.msra.mxu0 0.0
          %1026 = vmatprep.subr.mxu0 0.0
          %1027 = vmatpush1.msra.mxu0 0.0
          %1028 = vmatprep.subr.mxu0 0.0
          %1029 = vmatpush1.msra.mxu0 0.0
          %1030 = vmatprep.subr.mxu0 0.0
          %1031 = vmatpush1.msra.mxu0 0.0
          %1032 = vmatprep.subr.mxu0 0.0
          %1033 = vmatpush1.msra.mxu0 0.0
          %1034 = vmatprep.subr.mxu0 0.0
          %1035 = vmatpush1.msra.mxu0 0.0
          %1036 = vmatprep.subr.mxu0 0.0
          %1037 = vmatpush1.msra.mxu0 0.0
          %1038 = vmatprep.subr.mxu0 0.0
          %1039 = vmatpush1.msra.mxu0 0.0
          %1040 = vmatprep.subr.mxu0 0.0
          %1041 = vmatpush1.msra.mxu0 0.0
          %1042 = vmatprep.subr.mxu0 0.0
          %1043 = vmatpush1.msra.mxu0 0.0
          %1044 = vmatprep.subr.mxu0 0.0
          %1045 = vmatpush1.msra.mxu0 0.0
          %1046 = vmatprep.subr.mxu0 0.0
          %1047 = vmatpush1.msra.mxu0 0.0
          %1048 = vmatprep.subr.mxu0 0.0
          %1049 = vmatpush1.msra.mxu0 0.0
          %1050 = vmatprep.subr.mxu0 0.0
          %1051 = vmatpush1.msra.mxu0 0.0
          %1052 = vmatprep.subr.mxu0 0.0
          %1053 = vmatpush1.msra.mxu0 0.0
          %1054 = vmatprep.subr.mxu0 0.0
          %1055 = vmatpush1.msra.mxu0 0.0
          %1056 = vmatprep.subr.mxu0 0.0
          %1057 = vmatpush1.msra.mxu0 0.0
          %1058 = vmatprep.subr.mxu0 0.0
          %1059 = vmatpush1.msra.mxu0 0.0
          %1060 = vmatprep.mubr.f32.mxu0 0.0
          %1061 = vmatmul.mubr.f32.gmra.mrb[0].mxu0 %v990
          %v1062 = vpop.f32.mrb[0].mxu0
          %v1063 = vadd.f32 0.0, %v1062
          %v1064 = vpop.f32.mrb[0].mxu0
          %1065 = vdwg.mxu0
          %v1067 = vsel %vm988, %v974, 0
          %v1070 = vsel %vm992, %v977, 0
          %1072 = vmatprep.subr.mxu0 0.0
          %1073 = vmatpush1.msra.mxu0 %v975
          %1074 = vmatprep.subr.mxu0 0.0
          %1075 = vmatpush1.msra.mxu0 %v976
          %1076 = vmatprep.subr.mxu0 0.0
          %1077 = vmatpush1.msra.mxu0 %v1070
          %1078 = vmatprep.subr.mxu0 0.0
          %1079 = vmatpush1.msra.mxu0 0.0
          %1080 = vmatprep.subr.mxu0 0.0
          %1081 = vmatpush1.msra.mxu0 0.0
          %1082 = vmatprep.subr.mxu0 0.0
          %1083 = vmatpush1.msra.mxu0 0.0
          %1084 = vmatprep.subr.mxu0 0.0
          %1085 = vmatpush1.msra.mxu0 0.0
          %1086 = vmatprep.subr.mxu0 0.0
          %1087 = vmatpush1.msra.mxu0 0.0
          %1088 = vmatprep.subr.mxu0 0.0
          %1089 = vmatpush1.msra.mxu0 0.0
          %1090 = vmatprep.subr.mxu0 0.0
          %1091 = vmatpush1.msra.mxu0 0.0
          %1092 = vmatprep.subr.mxu0 0.0
          %1093 = vmatpush1.msra.mxu0 0.0
          %1094 = vmatprep.subr.mxu0 0.0
          %1095 = vmatpush1.msra.mxu0 0.0
          %1096 = vmatprep.subr.mxu0 0.0
          %1097 = vmatpush1.msra.mxu0 0.0
          %1098 = vmatprep.subr.mxu0 0.0
          %1099 = vmatpush1.msra.mxu0 0.0
          %1100 = vmatprep.subr.mxu0 0.0
          %1101 = vmatpush1.msra.mxu0 0.0
          %1102 = vmatprep.subr.mxu0 0.0
          %1103 = vmatpush1.msra.mxu0 0.0
          %1104 = vmatprep.subr.mxu0 0.0
          %1105 = vmatpush1.msra.mxu0 0.0
          %1106 = vmatprep.subr.mxu0 0.0
          %1107 = vmatpush1.msra.mxu0 0.0
          %1108 = vmatprep.subr.mxu0 0.0
          %1109 = vmatpush1.msra.mxu0 0.0
          %1110 = vmatprep.subr.mxu0 0.0
          %1111 = vmatpush1.msra.mxu0 0.0
          %1112 = vmatprep.subr.mxu0 0.0
          %1113 = vmatpush1.msra.mxu0 0.0
          %1114 = vmatprep.subr.mxu0 0.0
          %1115 = vmatpush1.msra.mxu0 0.0
          %1116 = vmatprep.subr.mxu0 0.0
          %1117 = vmatpush1.msra.mxu0 0.0
          %1118 = vmatprep.subr.mxu0 0.0
          %1119 = vmatpush1.msra.mxu0 0.0
          %1120 = vmatprep.subr.mxu0 0.0
          %1121 = vmatpush1.msra.mxu0 0.0
          %1122 = vmatprep.subr.mxu0 0.0
          %1123 = vmatpush1.msra.mxu0 0.0
          %1124 = vmatprep.subr.mxu0 0.0
          %1125 = vmatpush1.msra.mxu0 0.0
          %1126 = vmatprep.subr.mxu0 0.0
          %1127 = vmatpush1.msra.mxu0 0.0
          %1128 = vmatprep.subr.mxu0 0.0
          %1129 = vmatpush1.msra.mxu0 0.0
          %1130 = vmatprep.subr.mxu0 0.0
          %1131 = vmatpush1.msra.mxu0 0.0
          %1132 = vmatprep.subr.mxu0 0.0
          %1133 = vmatpush1.msra.mxu0 0.0
          %1134 = vmatprep.subr.mxu0 0.0
          %1135 = vmatpush1.msra.mxu0 0.0
          %1136 = vmatprep.mubr.f32.mxu0 0.0
          %1137 = vmatmul.mubr.f32.gmra.mrb[0].mxu0 %v1067
          %v1138 = vpop.f32.mrb[0].mxu0
          %v1139 = vadd.f32 %v1063, %v1138
          %v1140 = vpop.f32.mrb[0].mxu0
          %1141 = vdwg.mxu0
          %v1142 = vld [vmem:[%s934] sm:$0xff]
          %1143 = vset.pattern.permute.xlu0 0
          %1144 = vperm.xlu0 %1143, %v1142
          %v1145 = vpop.permute.xlu0 %1144
          %vm1146 = vcmp.eq.s32.totalorder %v968, %v1145
          %v1147 = vsel %vm1146, 1, 0
          %v1148 = vcvt.s32.f32 %v1147
          %v1149 = vld [vmem:[#allocation8] sm:$0xff]
          %v1150 = vld [vmem:[#allocation8 + $0x8] sm:$0xff]
          %v1151 = vld [vmem:[#allocation8 + $0x10] sm:$0x1]
          %v1153 = vsel %vm988, %v1148, 0
          %v1156 = vsel %vm992, %v1151, 0
          %1158 = vmatprep.subr.mxu0 0.0
          %1159 = vmatpush1.msra.mxu0 %v1149
          %1160 = vmatprep.subr.mxu0 0.0
          %1161 = vmatpush1.msra.mxu0 %v1150
          %1162 = vmatprep.subr.mxu0 0.0
          %1163 = vmatpush1.msra.mxu0 %v1156
          %1164 = vmatprep.subr.mxu0 0.0
          %1165 = vmatpush1.msra.mxu0 0.0
          %1166 = vmatprep.subr.mxu0 0.0
          %1167 = vmatpush1.msra.mxu0 0.0
          %1168 = vmatprep.subr.mxu0 0.0
          %1169 = vmatpush1.msra.mxu0 0.0
          %1170 = vmatprep.subr.mxu0 0.0
          %1171 = vmatpush1.msra.mxu0 0.0
          %1172 = vmatprep.subr.mxu0 0.0
          %1173 = vmatpush1.msra.mxu0 0.0
          %1174 = vmatprep.subr.mxu0 0.0
          %1175 = vmatpush1.msra.mxu0 0.0
          %1176 = vmatprep.subr.mxu0 0.0
          %1177 = vmatpush1.msra.mxu0 0.0
          %1178 = vmatprep.subr.mxu0 0.0
          %1179 = vmatpush1.msra.mxu0 0.0
          %1180 = vmatprep.subr.mxu0 0.0
          %1181 = vmatpush1.msra.mxu0 0.0
          %1182 = vmatprep.subr.mxu0 0.0
          %1183 = vmatpush1.msra.mxu0 0.0
          %1184 = vmatprep.subr.mxu0 0.0
          %1185 = vmatpush1.msra.mxu0 0.0
          %1186 = vmatprep.subr.mxu0 0.0
          %1187 = vmatpush1.msra.mxu0 0.0
          %1188 = vmatprep.subr.mxu0 0.0
          %1189 = vmatpush1.msra.mxu0 0.0
          %1190 = vmatprep.subr.mxu0 0.0
          %1191 = vmatpush1.msra.mxu0 0.0
          %1192 = vmatprep.subr.mxu0 0.0
          %1193 = vmatpush1.msra.mxu0 0.0
          %1194 = vmatprep.subr.mxu0 0.0
          %1195 = vmatpush1.msra.mxu0 0.0
          %1196 = vmatprep.subr.mxu0 0.0
          %1197 = vmatpush1.msra.mxu0 0.0
          %1198 = vmatprep.subr.mxu0 0.0
          %1199 = vmatpush1.msra.mxu0 0.0
          %1200 = vmatprep.subr.mxu0 0.0
          %1201 = vmatpush1.msra.mxu0 0.0
          %1202 = vmatprep.subr.mxu0 0.0
          %1203 = vmatpush1.msra.mxu0 0.0
          %1204 = vmatprep.subr.mxu0 0.0
          %1205 = vmatpush1.msra.mxu0 0.0
          %1206 = vmatprep.subr.mxu0 0.0
          %1207 = vmatpush1.msra.mxu0 0.0
          %1208 = vmatprep.subr.mxu0 0.0
          %1209 = vmatpush1.msra.mxu0 0.0
          %1210 = vmatprep.subr.mxu0 0.0
          %1211 = vmatpush1.msra.mxu0 0.0
          %1212 = vmatprep.subr.mxu0 0.0
          %1213 = vmatpush1.msra.mxu0 0.0
          %1214 = vmatprep.subr.mxu0 0.0
          %1215 = vmatpush1.msra.mxu0 0.0
          %1216 = vmatprep.subr.mxu0 0.0
          %1217 = vmatpush1.msra.mxu0 0.0
          %1218 = vmatprep.subr.mxu0 0.0
          %1219 = vmatpush1.msra.mxu0 0.0
          %1220 = vmatprep.subr.mxu0 0.0
          %1221 = vmatpush1.msra.mxu0 0.0
          %1222 = vmatprep.mubr.f32.mxu0 0.0
          %1223 = vmatmul.mubr.f32.gmra.mrb[0].mxu0 %v1153
          %v1224 = vpop.f32.mrb[0].mxu0
          %v1225 = vadd.f32 0.0, %v1224
          %v1226 = vpop.f32.mrb[0].mxu0
          %1227 = vdwg.mxu0
          %v1228 = vadd.f32 %v1139, %v1225
          %v1229 = vld [vmem:[#allocation9] sm:$0xff]
          %v1230 = vadd.f32 %v1228, %v1229
          %vm1231 = vcmask 261120
          %1232 = vst.msk [vmem:[#allocation2] sm:$0xff] %vm1231, %v1230
        $region132: #{tpu_custom_call.1} parent=95 // pred_fallthru
          _
        %v1233 = vld [vmem:[#allocation2] sm:$0xff]
        %v1234 = vpack.c.bf16 %v1233, %v1233
        %v1235 = vld [vmem:[%s790] sm:$0xf]
        %v1236 = vld [vmem:[%s790 + $0x4] sm:$0xf]
        %v1237 = vld [vmem:[%s790 + $0x8] sm:$0xf]
        %v1238 = vld [vmem:[%s790 + $0xc] sm:$0xf]
        %v1239 = vld [vmem:[%s937] sm:$0x1]
        %v1241 = vlaneseq
        %v1242 = vshrl.u32 %v1241, 7
        %v1243 = vsub.s32 0, %v1242
        %v1244 = vrot.slane %v1239, %v1243
        %v1250 = vunpack.c.l.b16 %v1235
        %v1251 = vunpack.c.l.b16 %v1236
        %v1252 = vunpack.c.l.b16 %v1237
        %v1253 = vunpack.c.l.b16 %v1238
        %v1254 = vpack.c.b16 %v1251, %v1250
        %v1255 = vpack.c.b16 %v1253, %v1252
        %vm1258 = vcmask 261120
        %v1260 = vsel %vm1258, %v1234, 0
        %1262 = vmatprep.subr.bf16.mxu0 0
        %1263 = vmatpush1.bf16.msra.mxu0 %v1254
        %1264 = vmatprep.subr.bf16.mxu0 0
        %1265 = vmatpush1.bf16.msra.mxu0 %v1255
        %1266 = vmatprep.subr.bf16.mxu0 0
        %1267 = vmatpush1.bf16.msra.mxu0 0
        %1268 = vmatprep.subr.bf16.mxu0 0
        %1269 = vmatpush1.bf16.msra.mxu0 0
        %1270 = vmatprep.subr.bf16.mxu0 0
        %1271 = vmatpush1.bf16.msra.mxu0 0
        %1272 = vmatprep.subr.bf16.mxu0 0
        %1273 = vmatpush1.bf16.msra.mxu0 0
        %1274 = vmatprep.subr.bf16.mxu0 0
        %1275 = vmatpush1.bf16.msra.mxu0 0
        %1276 = vmatprep.subr.bf16.mxu0 0
        %1277 = vmatpush1.bf16.msra.mxu0 0
        %1278 = vmatprep.subr.bf16.mxu0 0
        %1279 = vmatpush1.bf16.msra.mxu0 0
        %1280 = vmatprep.subr.bf16.mxu0 0
        %1281 = vmatpush1.bf16.msra.mxu0 0
        %1282 = vmatprep.subr.bf16.mxu0 0
        %1283 = vmatpush1.bf16.msra.mxu0 0
        %1284 = vmatprep.subr.bf16.mxu0 0
        %1285 = vmatpush1.bf16.msra.mxu0 0
        %1286 = vmatprep.subr.bf16.mxu0 0
        %1287 = vmatpush1.bf16.msra.mxu0 0
        %1288 = vmatprep.subr.bf16.mxu0 0
        %1289 = vmatpush1.bf16.msra.mxu0 0
        %1290 = vmatprep.subr.bf16.mxu0 0
        %1291 = vmatpush1.bf16.msra.mxu0 0
        %1292 = vmatprep.subr.bf16.mxu0 0
        %1293 = vmatpush1.bf16.msra.mxu0 0
        %1294 = vmatprep.mubr.bf16.mxu0 0
        %1295 = vmatmul.mubr.bf16.gmra.mrb[0].mxu0 %v1260
        %v1296 = vpop.f32.mrb[0].mxu0
        %v1297 = vadd.f32 %v1244, %v1296
        %v1298 = vpop.f32.mrb[0].mxu0
        %v1299 = vpop.f32.mrb[0].mxu0
        %v1300 = vpop.f32.mrb[0].mxu0
        %1301 = vdwg.mxu0
        %v1302 = vpack.c.bf16 %v1297, %v1297
        %v1303 = vld [vmem:[%s799] sm:$0xf]
        %v1304 = vld [vmem:[%s799 + $0x4] sm:$0xf]
        %v1305 = vld [vmem:[%s799 + $0x8] sm:$0xf]
        %v1306 = vld [vmem:[%s799 + $0xc] sm:$0xf]
        %1308 = vrot.lane.b32.xlu0 %v1302, 96
        %v1309 = vpop.permute.xlu0 %1308
        %vm1310 = vcmask 130048
        %v1312 = vsel %vm1310, %v1302, 0
        %v1315 = vsel %vm1310, %v1309, 0
        %1317 = vmatprep.subr.bf16.mxu0 0
        %1318 = vmatpush1.bf16.xpose.msra.mxu0 %v1315
        %1319 = vmatprep.subr.bf16.mxu0 0
        %1320 = vmatpush1.bf16.xpose.msra.mxu0 0
        %1321 = vmatprep.subr.bf16.mxu0 0
        %1322 = vmatpush1.bf16.xpose.msra.mxu0 0
        %1323 = vmatprep.subr.bf16.mxu0 0
        %1324 = vmatpush1.bf16.xpose.msra.mxu0 0
        %1325 = vmatprep.subr.bf16.mxu0 0
        %1326 = vmatpush1.bf16.xpose.msra.mxu0 0
        %1327 = vmatprep.subr.bf16.mxu0 0
        %1328 = vmatpush1.bf16.xpose.msra.mxu0 0
        %1329 = vmatprep.subr.bf16.mxu0 0
        %1330 = vmatpush1.bf16.xpose.msra.mxu0 0
        %1331 = vmatprep.subr.bf16.mxu0 0
        %1332 = vmatpush1.bf16.xpose.msra.mxu0 0
        %1333 = vmatprep.subr.bf16.mxu0 0
        %1334 = vmatpush1.bf16.xpose.msra.mxu0 0
        %1335 = vmatprep.subr.bf16.mxu0 0
        %1336 = vmatpush1.bf16.xpose.msra.mxu0 0
        %1337 = vmatprep.subr.bf16.mxu0 0
        %1338 = vmatpush1.bf16.xpose.msra.mxu0 0
        %1339 = vmatprep.subr.bf16.mxu0 0
        %1340 = vmatpush1.bf16.xpose.msra.mxu0 0
        %1341 = vmatprep.subr.bf16.mxu0 0
        %1342 = vmatpush1.bf16.xpose.msra.mxu0 0
        %1343 = vmatprep.subr.bf16.mxu0 0
        %1344 = vmatpush1.bf16.xpose.msra.mxu0 0
        %1345 = vmatprep.subr.bf16.mxu0 0
        %1346 = vmatpush1.bf16.xpose.msra.mxu0 0
        %1347 = vmatprep.subr.bf16.mxu0 0
        %1348 = vmatpush1.bf16.xpose.msra.mxu0 0
        %1349 = vmatprep.mubr.bf16.mxu0 0
        %1350 = vmatmul.mubr.bf16.gmra.mrb[0].mxu0 %v1312
        %v1351 = vpop.f32.mrb[0].mxu0
        %v1352 = vadd.f32 0.0, %v1351
        %v1353 = vpop.f32.mrb[0].mxu0
        %v1354 = vpop.f32.mrb[0].mxu0
        %v1355 = vpop.f32.mrb[0].mxu0
        %1356 = vdwg.mxu0
        %v1357 = vmul.f32 %v1352, 0.25
        %vm1358 = vcmask 64512
        %v1359 = vsel %vm1358, %v1357, -inf
        %1360 = vmax.xlane.f32.xlu0 %v1359
        %v1361 = vpop.xlane.xlu0 %1360
        %v1362 = vsub.f32 %v1357, %v1361
        %v1363 = vmul.f32 %v1362, 1.442695
        %v1364 = vpow.pop %v1363
        %v1365 = vsel %vm1358, %v1364, 0.0
        %1366 = vadd.xlane.f32.xlu0 %v1365
        %v1367 = vpop.xlane.xlu0 %1366
        %v1368 = vrcp.pop %v1367
        %v1369 = vmul.f32 %v1364, %v1368
        %v1370 = vpack.c.bf16 %v1369, %v1369
        %1371 = vrot.lane.b32.xlu0 %v1302, 64
        %v1372 = vpop.permute.xlu0 %1371
        %v1374 = vsel %vm1358, %v1370, 0
        %vm1376 = vcmask 1043456
        %v1378 = vsel %vm1376, %v1372, 0
        %1380 = vmatprep.subr.bf16.mxu0 0
        %1381 = vmatpush1.bf16.msra.mxu0 %v1378
        %1382 = vmatprep.subr.bf16.mxu0 0
        %1383 = vmatpush1.bf16.msra.mxu0 0
        %1384 = vmatprep.subr.bf16.mxu0 0
        %1385 = vmatpush1.bf16.msra.mxu0 0
        %1386 = vmatprep.subr.bf16.mxu0 0
        %1387 = vmatpush1.bf16.msra.mxu0 0
        %1388 = vmatprep.subr.bf16.mxu0 0
        %1389 = vmatpush1.bf16.msra.mxu0 0
        %1390 = vmatprep.subr.bf16.mxu0 0
        %1391 = vmatpush1.bf16.msra.mxu0 0
        %1392 = vmatprep.subr.bf16.mxu0 0
        %1393 = vmatpush1.bf16.msra.mxu0 0
        %1394 = vmatprep.subr.bf16.mxu0 0
        %1395 = vmatpush1.bf16.msra.mxu0 0
        %1396 = vmatprep.subr.bf16.mxu0 0
        %1397 = vmatpush1.bf16.msra.mxu0 0
        %1398 = vmatprep.subr.bf16.mxu0 0
        %1399 = vmatpush1.bf16.msra.mxu0 0
        %1400 = vmatprep.subr.bf16.mxu0 0
        %1401 = vmatpush1.bf16.msra.mxu0 0
        %1402 = vmatprep.subr.bf16.mxu0 0
        %1403 = vmatpush1.bf16.msra.mxu0 0
        %1404 = vmatprep.subr.bf16.mxu0 0
        %1405 = vmatpush1.bf16.msra.mxu0 0
        %1406 = vmatprep.subr.bf16.mxu0 0
        %1407 = vmatpush1.bf16.msra.mxu0 0
        %1408 = vmatprep.subr.bf16.mxu0 0
        %1409 = vmatpush1.bf16.msra.mxu0 0
        %1410 = vmatprep.subr.bf16.mxu0 0
        %1411 = vmatpush1.bf16.msra.mxu0 0
        %1412 = vmatprep.mubr.bf16.mxu0 0
        %1413 = vmatmul.mubr.bf16.gmra.mrb[0].mxu0 %v1374
        %v1414 = vpop.f32.mrb[0].mxu0
        %v1415 = vadd.f32 0.0, %v1414
        %v1416 = vpop.f32.mrb[0].mxu0
        %v1417 = vpop.f32.mrb[0].mxu0
        %v1418 = vpop.f32.mrb[0].mxu0
        %1419 = vdwg.mxu0
        %v1420 = vpack.c.bf16 %v1415, %v1415
        %1421 = vrot.lane.b32.xlu0 %v1302, 112
        %v1422 = vpop.permute.xlu0 %1421
        %1423 = vrot.lane.b32.xlu0 %v1302, 80
        %v1424 = vpop.permute.xlu0 %1423
        %v1426 = vsel %vm1310, %v1422, 0
        %v1429 = vsel %vm1310, %v1424, 0
        %1431 = vmatprep.subr.bf16.mxu0 0
        %1432 = vmatpush1.bf16.xpose.msra.mxu0 %v1429
        %1433 = vmatprep.subr.bf16.mxu0 0
        %1434 = vmatpush1.bf16.xpose.msra.mxu0 0
        %1435 = vmatprep.subr.bf16.mxu0 0
        %1436 = vmatpush1.bf16.xpose.msra.mxu0 0
        %1437 = vmatprep.subr.bf16.mxu0 0
        %1438 = vmatpush1.bf16.xpose.msra.mxu0 0
        %1439 = vmatprep.subr.bf16.mxu0 0
        %1440 = vmatpush1.bf16.xpose.msra.mxu0 0
        %1441 = vmatprep.subr.bf16.mxu0 0
        %1442 = vmatpush1.bf16.xpose.msra.mxu0 0
        %1443 = vmatprep.subr.bf16.mxu0 0
        %1444 = vmatpush1.bf16.xpose.msra.mxu0 0
        %1445 = vmatprep.subr.bf16.mxu0 0
        %1446 = vmatpush1.bf16.xpose.msra.mxu0 0
        %1447 = vmatprep.subr.bf16.mxu0 0
        %1448 = vmatpush1.bf16.xpose.msra.mxu0 0
        %1449 = vmatprep.subr.bf16.mxu0 0
        %1450 = vmatpush1.bf16.xpose.msra.mxu0 0
        %1451 = vmatprep.subr.bf16.mxu0 0
        %1452 = vmatpush1.bf16.xpose.msra.mxu0 0
        %1453 = vmatprep.subr.bf16.mxu0 0
        %1454 = vmatpush1.bf16.xpose.msra.mxu0 0
        %1455 = vmatprep.subr.bf16.mxu0 0
        %1456 = vmatpush1.bf16.xpose.msra.mxu0 0
        %1457 = vmatprep.subr.bf16.mxu0 0
        %1458 = vmatpush1.bf16.xpose.msra.mxu0 0
        %1459 = vmatprep.subr.bf16.mxu0 0
        %1460 = vmatpush1.bf16.xpose.msra.mxu0 0
        %1461 = vmatprep.subr.bf16.mxu0 0
        %1462 = vmatpush1.bf16.xpose.msra.mxu0 0
        %1463 = vmatprep.mubr.bf16.mxu0 0
        %1464 = vmatmul.mubr.bf16.gmra.mrb[0].mxu0 %v1426
        %v1465 = vpop.f32.mrb[0].mxu0
        %v1466 = vadd.f32 0.0, %v1465
        %v1467 = vpop.f32.mrb[0].mxu0
        %v1468 = vpop.f32.mrb[0].mxu0
        %v1469 = vpop.f32.mrb[0].mxu0
        %1470 = vdwg.mxu0
        %v1471 = vmul.f32 %v1466, 0.25
        %v1472 = vsel %vm1358, %v1471, -inf
        %1473 = vmax.xlane.f32.xlu0 %v1472
        %v1474 = vpop.xlane.xlu0 %1473
        %v1475 = vsub.f32 %v1471, %v1474
        %v1476 = vmul.f32 %v1475, 1.442695
        %v1477 = vpow.pop %v1476
        %v1478 = vsel %vm1358, %v1477, 0.0
        %1479 = vadd.xlane.f32.xlu0 %v1478
        %v1480 = vpop.xlane.xlu0 %1479
        %v1481 = vrcp.pop %v1480
        %v1482 = vmul.f32 %v1477, %v1481
        %v1483 = vpack.c.bf16 %v1482, %v1482
        %1484 = vrot.lane.b32.xlu0 %v1302, 48
        %v1485 = vpop.permute.xlu0 %1484
        %v1487 = vsel %vm1358, %v1483, 0
        %v1490 = vsel %vm1376, %v1485, 0
        %1492 = vmatprep.subr.bf16.mxu0 0
        %1493 = vmatpush1.bf16.msra.mxu0 %v1490
        %1494 = vmatprep.subr.bf16.mxu0 0
        %1495 = vmatpush1.bf16.msra.mxu0 0
        %1496 = vmatprep.subr.bf16.mxu0 0
        %1497 = vmatpush1.bf16.msra.mxu0 0
        %1498 = vmatprep.subr.bf16.mxu0 0
        %1499 = vmatpush1.bf16.msra.mxu0 0
        %1500 = vmatprep.subr.bf16.mxu0 0
        %1501 = vmatpush1.bf16.msra.mxu0 0
        %1502 = vmatprep.subr.bf16.mxu0 0
        %1503 = vmatpush1.bf16.msra.mxu0 0
        %1504 = vmatprep.subr.bf16.mxu0 0
        %1505 = vmatpush1.bf16.msra.mxu0 0
        %1506 = vmatprep.subr.bf16.mxu0 0
        %1507 = vmatpush1.bf16.msra.mxu0 0
        %1508 = vmatprep.subr.bf16.mxu0 0
        %1509 = vmatpush1.bf16.msra.mxu0 0
        %1510 = vmatprep.subr.bf16.mxu0 0
        %1511 = vmatpush1.bf16.msra.mxu0 0
        %1512 = vmatprep.subr.bf16.mxu0 0
        %1513 = vmatpush1.bf16.msra.mxu0 0
        %1514 = vmatprep.subr.bf16.mxu0 0
        %1515 = vmatpush1.bf16.msra.mxu0 0
        %1516 = vmatprep.subr.bf16.mxu0 0
        %1517 = vmatpush1.bf16.msra.mxu0 0
        %1518 = vmatprep.subr.bf16.mxu0 0
        %1519 = vmatpush1.bf16.msra.mxu0 0
        %1520 = vmatprep.subr.bf16.mxu0 0
        %1521 = vmatpush1.bf16.msra.mxu0 0
        %1522 = vmatprep.subr.bf16.mxu0 0
        %1523 = vmatpush1.bf16.msra.mxu0 0
        %1524 = vmatprep.mubr.bf16.mxu0 0
        %1525 = vmatmul.mubr.bf16.gmra.mrb[0].mxu0 %v1487
        %v1526 = vpop.f32.mrb[0].mxu0
        %v1527 = vadd.f32 0.0, %v1526
        %v1528 = vpop.f32.mrb[0].mxu0
        %v1529 = vpop.f32.mrb[0].mxu0
        %v1530 = vpop.f32.mrb[0].mxu0
        %1531 = vdwg.mxu0
        %v1532 = vpack.c.bf16 %v1527, %v1527
        %v1535 = vunpack.c.l.b16 %v1305
        %v1536 = vunpack.c.l.b16 %v1306
        %v1537 = vpack.c.b16 %v1536, %v1535
        %v1540 = vsel %vm1310, %v1532, 0
        %1542 = vmatprep.subr.bf16.mxu0 0
        %1543 = vmatpush1.bf16.msra.mxu0 %v1537
        %1544 = vmatprep.subr.bf16.mxu0 0
        %1545 = vmatpush1.bf16.msra.mxu0 0
        %1546 = vmatprep.subr.bf16.mxu0 0
        %1547 = vmatpush1.bf16.msra.mxu0 0
        %1548 = vmatprep.subr.bf16.mxu0 0
        %1549 = vmatpush1.bf16.msra.mxu0 0
        %1550 = vmatprep.subr.bf16.mxu0 0
        %1551 = vmatpush1.bf16.msra.mxu0 0
        %1552 = vmatprep.subr.bf16.mxu0 0
        %1553 = vmatpush1.bf16.msra.mxu0 0
        %1554 = vmatprep.subr.bf16.mxu0 0
        %1555 = vmatpush1.bf16.msra.mxu0 0
        %1556 = vmatprep.subr.bf16.mxu0 0
        %1557 = vmatpush1.bf16.msra.mxu0 0
        %1558 = vmatprep.subr.bf16.mxu0 0
        %1559 = vmatpush1.bf16.msra.mxu0 0
        %1560 = vmatprep.subr.bf16.mxu0 0
        %1561 = vmatpush1.bf16.msra.mxu0 0
        %1562 = vmatprep.subr.bf16.mxu0 0
        %1563 = vmatpush1.bf16.msra.mxu0 0
        %1564 = vmatprep.subr.bf16.mxu0 0
        %1565 = vmatpush1.bf16.msra.mxu0 0
        %1566 = vmatprep.subr.bf16.mxu0 0
        %1567 = vmatpush1.bf16.msra.mxu0 0
        %1568 = vmatprep.subr.bf16.mxu0 0
        %1569 = vmatpush1.bf16.msra.mxu0 0
        %1570 = vmatprep.subr.bf16.mxu0 0
        %1571 = vmatpush1.bf16.msra.mxu0 0
        %1572 = vmatprep.subr.bf16.mxu0 0
        %1573 = vmatpush1.bf16.msra.mxu0 0
        %1574 = vmatprep.mubr.bf16.mxu0 0
        %1575 = vmatmul.mubr.bf16.gmra.mrb[0].mxu0 %v1540
        %v1576 = vpop.f32.mrb[0].mxu0
        %v1577 = vadd.f32 0.0, %v1576
        %v1578 = vpop.f32.mrb[0].mxu0
        %v1579 = vpop.f32.mrb[0].mxu0
        %v1580 = vpop.f32.mrb[0].mxu0
        %1581 = vdwg.mxu0
        %v1584 = vunpack.c.l.b16 %v1303
        %v1585 = vunpack.c.l.b16 %v1304
        %v1586 = vpack.c.b16 %v1585, %v1584
        %v1589 = vsel %vm1310, %v1420, 0
        %1591 = vmatprep.subr.bf16.mxu0 0
        %1592 = vmatpush1.bf16.msra.mxu0 %v1586
        %1593 = vmatprep.subr.bf16.mxu0 0
        %1594 = vmatpush1.bf16.msra.mxu0 0
        %1595 = vmatprep.subr.bf16.mxu0 0
        %1596 = vmatpush1.bf16.msra.mxu0 0
        %1597 = vmatprep.subr.bf16.mxu0 0
        %1598 = vmatpush1.bf16.msra.mxu0 0
        %1599 = vmatprep.subr.bf16.mxu0 0
        %1600 = vmatpush1.bf16.msra.mxu0 0
        %1601 = vmatprep.subr.bf16.mxu0 0
        %1602 = vmatpush1.bf16.msra.mxu0 0
        %1603 = vmatprep.subr.bf16.mxu0 0
        %1604 = vmatpush1.bf16.msra.mxu0 0
        %1605 = vmatprep.subr.bf16.mxu0 0
        %1606 = vmatpush1.bf16.msra.mxu0 0
        %1607 = vmatprep.subr.bf16.mxu0 0
        %1608 = vmatpush1.bf16.msra.mxu0 0
        %1609 = vmatprep.subr.bf16.mxu0 0
        %1610 = vmatpush1.bf16.msra.mxu0 0
        %1611 = vmatprep.subr.bf16.mxu0 0
        %1612 = vmatpush1.bf16.msra.mxu0 0
        %1613 = vmatprep.subr.bf16.mxu0 0
        %1614 = vmatpush1.bf16.msra.mxu0 0
        %1615 = vmatprep.subr.bf16.mxu0 0
        %1616 = vmatpush1.bf16.msra.mxu0 0
        %1617 = vmatprep.subr.bf16.mxu0 0
        %1618 = vmatpush1.bf16.msra.mxu0 0
        %1619 = vmatprep.subr.bf16.mxu0 0
        %1620 = vmatpush1.bf16.msra.mxu0 0
        %1621 = vmatprep.subr.bf16.mxu0 0
        %1622 = vmatpush1.bf16.msra.mxu0 0
        %1623 = vmatprep.mubr.bf16.mxu0 0
        %1624 = vmatmul.mubr.bf16.gmra.mrb[0].mxu0 %v1589
        %v1625 = vpop.f32.mrb[0].mxu0
        %v1626 = vadd.f32 %v1577, %v1625
        %v1627 = vpop.f32.mrb[0].mxu0
        %v1628 = vpop.f32.mrb[0].mxu0
        %v1629 = vpop.f32.mrb[0].mxu0
        %1630 = vdwg.mxu0
        %v1631 = vld [vmem:[%s940] sm:$0x1]
        %v1633 = vlaneseq
        %v1634 = vshrl.u32 %v1633, 7
        %v1635 = vsub.s32 0, %v1634
        %v1636 = vrot.slane %v1631, %v1635
        %v1638 = vadd.f32 %v1626, %v1636
        %v1639 = vadd.f32 %v1233, %v1638
        %v1640 = vld [vmem:[%s943] sm:$0x1]
        %v1641 = vld [vmem:[%s807] sm:$0x1]
        %v1642 = vsel %vm1258, %v1639, 0.0
        %1643 = vadd.xlane.f32.xlu0 %v1642
        %v1644 = vpop.xlane.xlu0 %1643
        %v1645 = vrcp.pop 32.0
        %v1646 = vmul.f32 %v1644, %v1645
        %v1647 = vsub.f32 %v1639, %v1646
        %v1648 = vmul.f32 %v1647, %v1647
        %v1649 = vsel %vm1258, %v1648, 0.0
        %1650 = vadd.xlane.f32.xlu0 %v1649
        %v1651 = vpop.xlane.xlu0 %1650
        %v1652 = vmul.f32 %v1651, %v1645
        %v1653 = vadd.f32 %v1652, 1e-05
        %v1654 = vrsqrt.pop %v1653
        %v1655 = vmul.f32 %v1647, %v1654
        %v1657 = vlaneseq
        %v1658 = vshrl.u32 %v1657, 7
        %v1659 = vsub.s32 0, %v1658
        %v1660 = vrot.slane %v1640, %v1659
        %v1662 = vmul.f32 %v1655, %v1660
        %v1664 = vlaneseq
        %v1665 = vshrl.u32 %v1664, 7
        %v1666 = vsub.s32 0, %v1665
        %v1667 = vrot.slane %v1641, %v1666
        %v1669 = vadd.f32 %v1662, %v1667
        %v1670 = vlaneseq
        %v1671 = vshrl.u32 %v1670, 7
        %vm1672 = vcmp.eq.s32.totalorder %v1671, 0
        %v1673 = vrot.slane %v1669, 7
        %v1674 = vsel %vm1672, 1, 0
        %vm1675 = vcmp.eq.s32.totalorder %v1674, 1
        %v1676 = vsel %vm1675, 0.0, %v1673
        %vm1677 = vcmp.eq.s32.totalorder %v1671, 7
        %v1678 = vrot.slane %v1669, 1
        %v1679 = vsel %vm1677, 1, 0
        %vm1680 = vcmp.eq.s32.totalorder %v1679, 1
        %v1681 = vsel %vm1680, 0.0, %v1678
        %v1682 = vpack.c.bf16 %v1676, %v1676
        %v1683 = vld [vmem:[%s948] sm:$0xf]
        %v1684 = vld [vmem:[%s948 + $0x4] sm:$0xf]
        %v1685 = vld [vmem:[%s948 + $0x8] sm:$0xf]
        %v1686 = vld [vmem:[%s948 + $0xc] sm:$0xf]
        %v1687 = vpack.c.bf16 %v1669, %v1669
        %s1688 = scalar_lea.vmem %s948, 16
        %v1689 = vld [vmem:[%s1688] sm:$0xf]
        %v1690 = vld [vmem:[%s1688 + $0x4] sm:$0xf]
        %v1691 = vld [vmem:[%s1688 + $0x8] sm:$0xf]
        %v1692 = vld [vmem:[%s1688 + $0xc] sm:$0xf]
        %v1697 = vunpack.c.l.b16 %v1689
        %v1698 = vunpack.c.l.b16 %v1690
        %v1699 = vunpack.c.l.b16 %v1691
        %v1700 = vunpack.c.l.b16 %v1692
        %v1701 = vpack.c.b16 %v1698, %v1697
        %v1702 = vpack.c.b16 %v1700, %v1699
        %v1706 = vsel %vm1258, %v1687, 0
        %1708 = vmatprep.subr.bf16.mxu0 0
        %1709 = vmatpush1.bf16.msra.mxu0 %v1701
        %1710 = vmatprep.subr.bf16.mxu0 0
        %1711 = vmatpush1.bf16.msra.mxu0 %v1702
        %1712 = vmatprep.subr.bf16.mxu0 0
        %1713 = vmatpush1.bf16.msra.mxu0 0
        %1714 = vmatprep.subr.bf16.mxu0 0
        %1715 = vmatpush1.bf16.msra.mxu0 0
        %1716 = vmatprep.subr.bf16.mxu0 0
        %1717 = vmatpush1.bf16.msra.mxu0 0
        %1718 = vmatprep.subr.bf16.mxu0 0
        %1719 = vmatpush1.bf16.msra.mxu0 0
        %1720 = vmatprep.subr.bf16.mxu0 0
        %1721 = vmatpush1.bf16.msra.mxu0 0
        %1722 = vmatprep.subr.bf16.mxu0 0
        %1723 = vmatpush1.bf16.msra.mxu0 0
        %1724 = vmatprep.subr.bf16.mxu0 0
        %1725 = vmatpush1.bf16.msra.mxu0 0
        %1726 = vmatprep.subr.bf16.mxu0 0
        %1727 = vmatpush1.bf16.msra.mxu0 0
        %1728 = vmatprep.subr.bf16.mxu0 0
        %1729 = vmatpush1.bf16.msra.mxu0 0
        %1730 = vmatprep.subr.bf16.mxu0 0
        %1731 = vmatpush1.bf16.msra.mxu0 0
        %1732 = vmatprep.subr.bf16.mxu0 0
        %1733 = vmatpush1.bf16.msra.mxu0 0
        %1734 = vmatprep.subr.bf16.mxu0 0
        %1735 = vmatpush1.bf16.msra.mxu0 0
        %1736 = vmatprep.subr.bf16.mxu0 0
        %1737 = vmatpush1.bf16.msra.mxu0 0
        %1738 = vmatprep.subr.bf16.mxu0 0
        %1739 = vmatpush1.bf16.msra.mxu0 0
        %1740 = vmatprep.mubr.bf16.mxu0 0
        %1741 = vmatmul.mubr.bf16.gmra.mrb[0].mxu0 %v1706
        %v1742 = vpop.f32.mrb[0].mxu0
        %v1743 = vadd.f32 0.0, %v1742
        %v1744 = vpop.f32.mrb[0].mxu0
        %v1745 = vpop.f32.mrb[0].mxu0
        %v1746 = vpop.f32.mrb[0].mxu0
        %1747 = vdwg.mxu0
        %v1752 = vunpack.c.l.b16 %v1683
        %v1753 = vunpack.c.l.b16 %v1684
        %v1754 = vunpack.c.l.b16 %v1685
        %v1755 = vunpack.c.l.b16 %v1686
        %v1756 = vpack.c.b16 %v1753, %v1752
        %v1757 = vpack.c.b16 %v1755, %v1754
        %v1761 = vsel %vm1258, %v1682, 0
        %1763 = vmatprep.subr.bf16.mxu0 0
        %1764 = vmatpush1.bf16.msra.mxu0 %v1756
        %1765 = vmatprep.subr.bf16.mxu0 0
        %1766 = vmatpush1.bf16.msra.mxu0 %v1757
        %1767 = vmatprep.subr.bf16.mxu0 0
        %1768 = vmatpush1.bf16.msra.mxu0 0
        %1769 = vmatprep.subr.bf16.mxu0 0
        %1770 = vmatpush1.bf16.msra.mxu0 0
        %1771 = vmatprep.subr.bf16.mxu0 0
        %1772 = vmatpush1.bf16.msra.mxu0 0
        %1773 = vmatprep.subr.bf16.mxu0 0
        %1774 = vmatpush1.bf16.msra.mxu0 0
        %1775 = vmatprep.subr.bf16.mxu0 0
        %1776 = vmatpush1.bf16.msra.mxu0 0
        %1777 = vmatprep.subr.bf16.mxu0 0
        %1778 = vmatpush1.bf16.msra.mxu0 0
        %1779 = vmatprep.subr.bf16.mxu0 0
        %1780 = vmatpush1.bf16.msra.mxu0 0
        %1781 = vmatprep.subr.bf16.mxu0 0
        %1782 = vmatpush1.bf16.msra.mxu0 0
        %1783 = vmatprep.subr.bf16.mxu0 0
        %1784 = vmatpush1.bf16.msra.mxu0 0
        %1785 = vmatprep.subr.bf16.mxu0 0
        %1786 = vmatpush1.bf16.msra.mxu0 0
        %1787 = vmatprep.subr.bf16.mxu0 0
        %1788 = vmatpush1.bf16.msra.mxu0 0
        %1789 = vmatprep.subr.bf16.mxu0 0
        %1790 = vmatpush1.bf16.msra.mxu0 0
        %1791 = vmatprep.subr.bf16.mxu0 0
        %1792 = vmatpush1.bf16.msra.mxu0 0
        %1793 = vmatprep.subr.bf16.mxu0 0
        %1794 = vmatpush1.bf16.msra.mxu0 0
        %1795 = vmatprep.mubr.bf16.mxu0 0
        %1796 = vmatmul.mubr.bf16.gmra.mrb[0].mxu0 %v1761
        %v1797 = vpop.f32.mrb[0].mxu0
        %v1798 = vadd.f32 %v1743, %v1797
        %v1799 = vpop.f32.mrb[0].mxu0
        %v1800 = vpop.f32.mrb[0].mxu0
        %v1801 = vpop.f32.mrb[0].mxu0
        %1802 = vdwg.mxu0
        %v1803 = vpack.c.bf16 %v1681, %v1681
        %s1804 = scalar_lea.vmem %s948, 32
        %v1805 = vld [vmem:[%s1804] sm:$0xf]
        %v1806 = vld [vmem:[%s1804 + $0x4] sm:$0xf]
        %v1807 = vld [vmem:[%s1804 + $0x8] sm:$0xf]
        %v1808 = vld [vmem:[%s1804 + $0xc] sm:$0xf]
        %v1813 = vunpack.c.l.b16 %v1805
        %v1814 = vunpack.c.l.b16 %v1806
        %v1815 = vunpack.c.l.b16 %v1807
        %v1816 = vunpack.c.l.b16 %v1808
        %v1817 = vpack.c.b16 %v1814, %v1813
        %v1818 = vpack.c.b16 %v1816, %v1815
        %v1822 = vsel %vm1258, %v1803, 0
        %1824 = vmatprep.subr.bf16.mxu0 0
        %1825 = vmatpush1.bf16.msra.mxu0 %v1817
        %1826 = vmatprep.subr.bf16.mxu0 0
        %1827 = vmatpush1.bf16.msra.mxu0 %v1818
        %1828 = vmatprep.subr.bf16.mxu0 0
        %1829 = vmatpush1.bf16.msra.mxu0 0
        %1830 = vmatprep.subr.bf16.mxu0 0
        %1831 = vmatpush1.bf16.msra.mxu0 0
        %1832 = vmatprep.subr.bf16.mxu0 0
        %1833 = vmatpush1.bf16.msra.mxu0 0
        %1834 = vmatprep.subr.bf16.mxu0 0
        %1835 = vmatpush1.bf16.msra.mxu0 0
        %1836 = vmatprep.subr.bf16.mxu0 0
        %1837 = vmatpush1.bf16.msra.mxu0 0
        %1838 = vmatprep.subr.bf16.mxu0 0
        %1839 = vmatpush1.bf16.msra.mxu0 0
        %1840 = vmatprep.subr.bf16.mxu0 0
        %1841 = vmatpush1.bf16.msra.mxu0 0
        %1842 = vmatprep.subr.bf16.mxu0 0
        %1843 = vmatpush1.bf16.msra.mxu0 0
        %1844 = vmatprep.subr.bf16.mxu0 0
        %1845 = vmatpush1.bf16.msra.mxu0 0
        %1846 = vmatprep.subr.bf16.mxu0 0
        %1847 = vmatpush1.bf16.msra.mxu0 0
        %1848 = vmatprep.subr.bf16.mxu0 0
        %1849 = vmatpush1.bf16.msra.mxu0 0
        %1850 = vmatprep.subr.bf16.mxu0 0
        %1851 = vmatpush1.bf16.msra.mxu0 0
        %1852 = vmatprep.subr.bf16.mxu0 0
        %1853 = vmatpush1.bf16.msra.mxu0 0
        %1854 = vmatprep.subr.bf16.mxu0 0
        %1855 = vmatpush1.bf16.msra.mxu0 0
        %1856 = vmatprep.mubr.bf16.mxu0 0
        %1857 = vmatmul.mubr.bf16.gmra.mrb[0].mxu0 %v1822
        %v1858 = vpop.f32.mrb[0].mxu0
        %v1859 = vadd.f32 0.0, %v1858
        %v1860 = vpop.f32.mrb[0].mxu0
        %v1861 = vpop.f32.mrb[0].mxu0
        %v1862 = vpop.f32.mrb[0].mxu0
        %1863 = vdwg.mxu0
        %v1864 = vadd.f32 %v1798, %v1859
        %v1865 = vld [vmem:[%s951] sm:$0x1]
        %v1867 = vlaneseq
        %v1868 = vshrl.u32 %v1867, 7
        %v1869 = vsub.s32 0, %v1868
        %v1870 = vrot.slane %v1865, %v1869
        %v1872 = vadd.f32 %v1864, %v1870
        %v1873 = vmax.f32 %v1872, 0.0
        %v1874 = vpack.c.bf16 %v1873, %v1873
        %v1875 = vld [vmem:[%s816] sm:$0xf]
        %v1876 = vld [vmem:[%s816 + $0x4] sm:$0xf]
        %v1877 = vld [vmem:[%s816 + $0x8] sm:$0xf]
        %v1878 = vld [vmem:[%s816 + $0xc] sm:$0xf]
        %v1879 = vld [vmem:[%s954] sm:$0x1]
        %v1881 = vlaneseq
        %v1882 = vshrl.u32 %v1881, 7
        %v1883 = vsub.s32 0, %v1882
        %v1884 = vrot.slane %v1879, %v1883
        %v1890 = vunpack.c.l.b16 %v1875
        %v1891 = vunpack.c.l.b16 %v1876
        %v1892 = vunpack.c.l.b16 %v1877
        %v1893 = vunpack.c.l.b16 %v1878
        %v1894 = vpack.c.b16 %v1891, %v1890
        %v1895 = vpack.c.b16 %v1893, %v1892
        %v1899 = vsel %vm1258, %v1874, 0
        %1901 = vmatprep.subr.bf16.mxu0 0
        %1902 = vmatpush1.bf16.msra.mxu0 %v1894
        %1903 = vmatprep.subr.bf16.mxu0 0
        %1904 = vmatpush1.bf16.msra.mxu0 %v1895
        %1905 = vmatprep.subr.bf16.mxu0 0
        %1906 = vmatpush1.bf16.msra.mxu0 0
        %1907 = vmatprep.subr.bf16.mxu0 0
        %1908 = vmatpush1.bf16.msra.mxu0 0
        %1909 = vmatprep.subr.bf16.mxu0 0
        %1910 = vmatpush1.bf16.msra.mxu0 0
        %1911 = vmatprep.subr.bf16.mxu0 0
        %1912 = vmatpush1.bf16.msra.mxu0 0
        %1913 = vmatprep.subr.bf16.mxu0 0
        %1914 = vmatpush1.bf16.msra.mxu0 0
        %1915 = vmatprep.subr.bf16.mxu0 0
        %1916 = vmatpush1.bf16.msra.mxu0 0
        %1917 = vmatprep.subr.bf16.mxu0 0
        %1918 = vmatpush1.bf16.msra.mxu0 0
        %1919 = vmatprep.subr.bf16.mxu0 0
        %1920 = vmatpush1.bf16.msra.mxu0 0
        %1921 = vmatprep.subr.bf16.mxu0 0
        %1922 = vmatpush1.bf16.msra.mxu0 0
        %1923 = vmatprep.subr.bf16.mxu0 0
        %1924 = vmatpush1.bf16.msra.mxu0 0
        %1925 = vmatprep.subr.bf16.mxu0 0
        %1926 = vmatpush1.bf16.msra.mxu0 0
        %1927 = vmatprep.subr.bf16.mxu0 0
        %1928 = vmatpush1.bf16.msra.mxu0 0
        %1929 = vmatprep.subr.bf16.mxu0 0
        %1930 = vmatpush1.bf16.msra.mxu0 0
        %1931 = vmatprep.subr.bf16.mxu0 0
        %1932 = vmatpush1.bf16.msra.mxu0 0
        %1933 = vmatprep.mubr.bf16.mxu0 0
        %1934 = vmatmul.mubr.bf16.gmra.mrb[0].mxu0 %v1899
        %v1935 = vpop.f32.mrb[0].mxu0
        %v1936 = vadd.f32 %v1884, %v1935
        %v1937 = vpop.f32.mrb[0].mxu0
        %v1938 = vpop.f32.mrb[0].mxu0
        %v1939 = vpop.f32.mrb[0].mxu0
        %1940 = vdwg.mxu0
        %v1941 = vadd.f32 %v1669, %v1936
        %v1942 = vld [vmem:[%s957] sm:$0x1]
        %v1943 = vld [vmem:[%s960] sm:$0x1]
        %v1944 = vsel %vm1258, %v1941, 0.0
        %1945 = vadd.xlane.f32.xlu0 %v1944
        %v1946 = vpop.xlane.xlu0 %1945
        %v1947 = vmul.f32 %v1946, %v1645
        %v1948 = vsub.f32 %v1941, %v1947
        %v1949 = vmul.f32 %v1948, %v1948
        %v1950 = vsel %vm1258, %v1949, 0.0
        %1951 = vadd.xlane.f32.xlu0 %v1950
        %v1952 = vpop.xlane.xlu0 %1951
        %v1953 = vmul.f32 %v1952, %v1645
        %v1954 = vadd.f32 %v1953, 1e-05
        %v1955 = vrsqrt.pop %v1954
        %v1956 = vmul.f32 %v1948, %v1955
        %v1958 = vlaneseq
        %v1959 = vshrl.u32 %v1958, 7
        %v1960 = vsub.s32 0, %v1959
        %v1961 = vrot.slane %v1942, %v1960
        %v1963 = vmul.f32 %v1956, %v1961
        %v1965 = vlaneseq
        %v1966 = vshrl.u32 %v1965, 7
        %v1967 = vsub.s32 0, %v1966
        %v1968 = vrot.slane %v1943, %v1967
        %v1970 = vadd.f32 %v1963, %v1968
        %1971 = vst.msk [vmem:[#allocation2] sm:$0xff] %vm1258, %v1970
        %p1972 = scmp.eq.s32.totalorder %s41, 1
        // Predicated region
        $region133: #{tpu_custom_call.1} parent=95 // pred_check
          %p1973 = pneg %p1972
        $region134: #{tpu_custom_call.1} parent=95 // pred_check_branch
          %1975 = sbr.rel (%p1973) target = $region136
        $region135: #{tpu_custom_call.1} parent=95 // pred_region
          %1976 = vst.msk [vmem:[%s922] sm:$0xff] %vm1258, %v1970
        $region136: #{tpu_custom_call.1} parent=95 // pred_fallthru
          _
        %s1977 = sand.u32 %s530, 1
        %s1978 = scalar_lea.sflag [#allocation5], %s1977
        %s1979 = sand.u32 %s530, 1
        %s1980 = smul.addr %s1979, 8
        %s1981 = scalar_lea.vmem [#allocation15], %s1980
        // Predicated region
        $region137: #{tpu_custom_call.1} parent=95 // pred_check
          %p1982 = pneg %p540
        $region138: #{tpu_custom_call.1} parent=95 // pred_check_branch
          %1984 = sbr.rel (%p1982) target = $region140
        $region139: #{tpu_custom_call.1} parent=95 // pred_region
          %s1986 = ssub.s32 128, 128
          %1987 = vsyncadd %s1978, %s1986
          %s1988 = smul.addr %s40, 128
          %s1989 = scalar_lea.hbm %s19, %s1988
          %s1991 = sshll.u32 %s1981, 4
          %s1992 = int_to_ptr.vmem [resolvable:$true] %s1991
          %1994 = dma.vmem_to_hbm [thread:$0]  %s1992, 128, %s1989, %s1978
        $region140: #{tpu_custom_call.1} parent=95 // pred_fallthru
          _
      $region96: #{tpu_custom_call.1} parent=5 // pred_fallthru
        _
      %p1995 = scmp.le.s32.totalorder 2, %s31
      // Predicated region
      $region141: #{tpu_custom_call.1} parent=5 // pred_check
        %p1996 = pneg %p1995
      $region142: #{tpu_custom_call.1} parent=5 // pred_check_branch
        %1998 = sbr.rel (%p1996) target = $region144
      $region143: #{tpu_custom_call.1} parent=5 // pred_region
        %s1999 = ssub.s32 %s31, 2
        // Predicated region
        $region145: #{tpu_custom_call.1} parent=143 // pred_check
          %p2000 = pneg %p546
        $region146: #{tpu_custom_call.1} parent=143 // pred_check_branch
          %2002 = sbr.rel (%p2000) target = $region148
        $region147: #{tpu_custom_call.1} parent=143 // pred_region
          %s2003 = sand.u32 %s531, 1
          %s2004 = scalar_lea.sflag [#allocation5], %s2003
          %s2005 = sand.u32 %s531, 1
          %s2006 = smul.addr %s2005, 8
          %s2007 = scalar_lea.vmem [#allocation15], %s2006
          %2008 = dma.done %s2004, 128
        $region148: #{tpu_custom_call.1} parent=143 // pred_fallthru
          _
      $region144: #{tpu_custom_call.1} parent=5 // pred_fallthru
        _
    $region6: #{tpu_custom_call.1} parent=1 // loop_footer
      %s35 = sadd.s32 1, %s31
    $region7: #{tpu_custom_call.1} parent=1 // loop_footer_branch
      %30 = sbr.rel target = $region3
    $region8: #{tpu_custom_call.1} parent=1 // loop_exit
      _
    %2009 = vsyncpa [#allocation4], 1
    %s2010 = scalar_lea.sflag [#allocation4], 1
    %2011 = vsyncpa %s2010, 1
    %2012 = vsyncpa [#allocation7], 1
    %2013 = vsyncpa [#allocation10], 1
    %2014 = vsyncpa [#allocation5], 1
    %s2015 = scalar_lea.sflag [#allocation5], 1
    %2016 = vsyncpa %s2015, 1

</llo_original>
